<compile_context>
chip_gen: v5e
topology: v5e:2x2
jax: 0.10.0
libtpu: 0.0.40
codegen_flags: <defaults>
</compile_context>

<pallas_src>
import math
import numpy as np

import jax
import jax.numpy as jnp
from jax.experimental import pallas as pl
from jax.experimental.pallas import tpu as pltpu

# ----- shapes consistent with Encoder(infeature, embsize, num_hidden, head) -----
B = 2              # batch
S = 8              # infeature (sequence length)
E = 32             # embsize
H = 32             # num_hidden (== embsize, required by the module's residuals)
HEADS = 4
HEAD_DIM = H // HEADS
FF = 256           # Mlp hidden size (hard-coded 256 in ffnlayer)
EPS = 1e-5         # nn.LayerNorm default eps
RATIO = 0.5        # ffnlayer calls MultiAtt(x, x, x, 0.5)

# packed "small param" row layout: one (8, FF) array per layer
_ROW_BQKV, _ROW_B1, _ROW_BO, _ROW_LNG, _ROW_LNB, _ROW_B2 = range(6)
LAYER_ORDER = ("wqkv", "wo", "w1", "w2", "small")


# ------------------------------ in-kernel math helpers ------------------------------
def _erf(x):
    # Abramowitz & Stegun 7.1.26 (max abs err ~1.5e-7); keeps exact-erf GELU semantics
    # without relying on an erf lowering inside Mosaic.
    a1, a2, a3, a4, a5 = 0.254829592, -0.284496736, 1.421413741, -1.453152027, 1.061405429
    p = 0.3275911
    sgn = jnp.where(x >= 0.0, 1.0, -1.0)
    ax = jnp.abs(x)
    t = 1.0 / (1.0 + p * ax)
    poly = ((((a5 * t + a4) * t + a3) * t + a2) * t + a1) * t
    return sgn * (1.0 - poly * jnp.exp(-ax * ax))


def _gelu(x):
    # torch.nn.GELU() default = exact (erf-based) GELU
    return 0.5 * x * (1.0 + _erf(x * (1.0 / math.sqrt(2.0))))


def _layernorm(x, g, b):
    mu = jnp.mean(x, axis=-1, keepdims=True)
    xc = x - mu
    var = jnp.mean(xc * xc, axis=-1, keepdims=True)
    return xc * jax.lax.rsqrt(var + EPS) * g + b


# ------------------------------------ fused kernel ----------------------------------
def fused_encoder_kernel(x_ref, emb_ref,
                         wqkv1_ref, wo1_ref, w11_ref, w21_ref, sm1_ref,
                         wqkv2_ref, wo2_ref, w12_ref, w22_ref, sm2_ref,
                         o_ref):
    f32 = jnp.float32
    scale = 1.0 / math.sqrt(S)   # reference scales by sqrt(query.shape[1]) == seq length

    def ffn(x, wqkv_ref, wo_ref, w1_ref, w2_ref, sm_ref):
        sm = sm_ref[...]                                   # (8, FF) packed small params
        bqkv = sm[_ROW_BQKV:_ROW_BQKV + 1, 0:3 * H]        # (1, 3H)
        b1   = sm[_ROW_B1:_ROW_B1 + 1, 0:FF]               # (1, FF)
        bo   = sm[_ROW_BO:_ROW_BO + 1, 0:H]
        g    = sm[_ROW_LNG:_ROW_LNG + 1, 0:E]
        beta = sm[_ROW_LNB:_ROW_LNB + 1, 0:E]
        b2   = sm[_ROW_B2:_ROW_B2 + 1, 0:H]

        # ---- PostiveMultiheadAttention: fused QKV projection (one (S,E)@(E,3H) MXU op) ----
        qkv = jnp.dot(x, wqkv_ref[...], preferred_element_type=f32) + bqkv    # (S, 3H)
        q, k, v = qkv[:, 0:H], qkv[:, H:2 * H], qkv[:, 2 * H:3 * H]

        attn = None
        for h in range(HEADS):            # static unroll over heads (transpose_qkv split)
            lo, hi = h * HEAD_DIM, (h + 1) * HEAD_DIM
            qh, kh, vh = q[:, lo:hi], k[:, lo:hi], v[:, lo:hi]
            s_h = jax.lax.dot_general(qh, kh, (((1,), (1,)), ((), ())),
                                      preferred_element_type=f32) * scale     # (S, S)
            m = jnp.max(s_h, axis=-1, keepdims=True)
            e = jnp.exp(s_h - m)
            p = e / jnp.sum(e, axis=-1, keepdims=True)                        # softmax
            # positive mask: sigmoid(s) > 0.5  <=>  s > 0  (exact identity, no EUP sigmoid)
            p = jnp.where(s_h > 0.0, p, 0.0)
            head_out = jnp.dot(p, vh, preferred_element_type=f32)             # (S, HEAD_DIM)
            # fold W_o in per head (== concat(heads) @ W_o); no scratch / masked col stores
            contrib = jnp.dot(head_out, wo_ref[lo:hi, :],
                              preferred_element_type=f32)                     # (S, H)
            attn = contrib if attn is None else attn + contrib
        attn = attn + bo

        # ---- residual + shared LayerNorm ----
        x = x + _layernorm(attn, g, beta)

        # ---- Mlp (fc1 -> GELU -> fc2); dropout = identity in eval mode ----
        h1 = _gelu(jnp.dot(x, w1_ref[...], preferred_element_type=f32) + b1)
        m2 = jnp.dot(h1, w2_ref[...], preferred_element_type=f32) + b2
        return x + _layernorm(m2, g, beta)

    x = x_ref[0] + emb_ref[...]                            # Encoder: x + emb.weight
    x = ffn(x, wqkv1_ref, wo1_ref, w11_ref, w21_ref, sm1_ref)
    x = ffn(x, wqkv2_ref, wo2_ref, w12_ref, w22_ref, sm2_ref)
    o_ref[0] = x


# ------------------------------------ wrapper ---------------------------------------
def _rep_spec(shape):
    nd = len(shape)
    return pl.BlockSpec(shape, lambda b, _nd=nd: (0,) * _nd)   # same block every grid step


@jax.jit
def encoder_forward(x, emb_w, packed1, packed2):
    weights = [packed1[n] for n in LAYER_ORDER] + [packed2[n] for n in LAYER_ORDER]
    return pl.pallas_call(
        fused_encoder_kernel,
        out_shape=jax.ShapeDtypeStruct((B, S, E), jnp.float32),
        grid=(B,),
        in_specs=[pl.BlockSpec((1, S, E), lambda b: (b, 0, 0)),
                  _rep_spec((S, E))]
                 + [_rep_spec(tuple(w.shape)) for w in weights],
        out_specs=pl.BlockSpec((1, S, E), lambda b: (b, 0, 0)),
        compiler_params=pltpu.CompilerParams(dimension_semantics=("parallel",)),
    )(x, emb_w, *weights)


# ---------------------------- deterministic parameter init ---------------------------
def init_ffn_params(key):
    ks = jax.random.split(key, 12)
    w = lambda k, shape, s: s * jax.random.normal(k, shape, dtype=jnp.float32)
    return {
        "wq": w(ks[0], (E, H), 0.08),  "bq": w(ks[1], (1, H), 0.02),
        "wk": w(ks[2], (E, H), 0.08),  "bk": w(ks[3], (1, H), 0.02),
        "wv": w(ks[4], (E, H), 0.08),  "bv": w(ks[5], (1, H), 0.02),
        "wo": w(ks[6], (H, H), 0.08),  "bo": w(ks[7], (1, H), 0.02),
        "ln_g": jnp.ones((1, E), jnp.float32),
        "ln_b": jnp.zeros((1, E), jnp.float32),
        "w1": w(ks[8], (H, FF), 0.08), "b1": w(ks[9], (1, FF), 0.02),
        "w2": w(ks[10], (FF, H), 0.08), "b2": w(ks[11], (1, H), 0.02),
    }


def pack_ffn_params(p):
    """Pack per-layer params for the kernel: fused QKV weight + one small-param blob."""
    small = jnp.zeros((8, FF), jnp.float32)
    small = small.at[_ROW_BQKV, 0:3 * H].set(
        jnp.concatenate([p["bq"][0], p["bk"][0], p["bv"][0]], axis=0))
    small = small.at[_ROW_B1, 0:FF].set(p["b1"][0])
    small = small.at[_ROW_BO, 0:H].set(p["bo"][0])
    small = small.at[_ROW_LNG, 0:E].set(p["ln_g"][0])
    small = small.at[_ROW_LNB, 0:E].set(p["ln_b"][0])
    small = small.at[_ROW_B2, 0:H].set(p["b2"][0])
    return {
        "wqkv": jnp.concatenate([p["wq"], p["wk"], p["wv"]], axis=1),   # (E, 3H)
        "wo": p["wo"],
        "w1": p["w1"],
        "w2": p["w2"],
        "small": small,                                                 # (8, FF)
    }


# ------------------------------- plain-JAX reference ---------------------------------
def ref_ffn(x, p):
    def ln(t):
        mu = t.mean(-1, keepdims=True)
        var = ((t - mu) ** 2).mean(-1, keepdims=True)
        return (t - mu) / jnp.sqrt(var + EPS) * p["ln_g"][0] + p["ln_b"][0]

    q = x @ p["wq"] + p["bq"][0]
    k = x @ p["wk"] + p["bk"][0]
    v = x @ p["wv"] + p["bv"][0]
    split = lambda t: t.reshape(B, S, HEADS, HEAD_DIM).transpose(0, 2, 1, 3)
    qh, kh, vh = split(q), split(k), split(v)
    s = jnp.einsum("bhqd,bhkd->bhqk", qh, kh) / math.sqrt(S)
    att = jax.nn.softmax(s, axis=-1)
    att = jnp.where(jax.nn.sigmoid(s) > RATIO, att, 0.0)
    o = jnp.einsum("bhqk,bhkd->bhqd", att, vh).transpose(0, 2, 1, 3).reshape(B, S, H)
    attn = o @ p["wo"] + p["bo"][0]
    x = x + ln(attn)
    h1 = jax.nn.gelu(x @ p["w1"] + p["b1"][0], approximate=False)
    m2 = h1 @ p["w2"] + p["b2"][0]
    return x + ln(m2)


def ref_encoder(x, emb_w, p1, p2):
    x = x + emb_w[None]
    x = ref_ffn(x, p1)
    return ref_ffn(x, p2)


# -------------------------------------- main -----------------------------------------
if __name__ == "__main__":
    key = jax.random.PRNGKey(0)
    kx, kemb, k1, k2 = jax.random.split(key, 4)
    x = jax.random.normal(kx, (B, S, E), dtype=jnp.float32)
    emb_w = 0.1 * jax.random.normal(kemb, (S, E), dtype=jnp.float32)   # nn.Embedding(S, E).weight
    p1 = init_ffn_params(k1)
    p2 = init_ffn_params(k2)

    out = jax.block_until_ready(
        encoder_forward(x, emb_w, pack_ffn_params(p1), pack_ffn_params(p2)))

    ref = ref_encoder(x, emb_w, p1, p2)
    np.testing.assert_allclose(np.asarray(out), np.asarray(ref), rtol=2e-3, atol=2e-3)
    print("KERNEL_OK")
</pallas_src>

<mosaic_0001>
module attributes {stable_mosaic.version = 11 : i64} {
  func.func @fused_encoder_kernel(%arg0: i32, %arg1: memref<1x8x32xf32, #tpu.memory_space<vmem>>, %arg2: memref<8x32xf32, #tpu.memory_space<vmem>>, %arg3: memref<32x96xf32, #tpu.memory_space<vmem>>, %arg4: memref<32x32xf32, #tpu.memory_space<vmem>>, %arg5: memref<32x256xf32, #tpu.memory_space<vmem>>, %arg6: memref<256x32xf32, #tpu.memory_space<vmem>>, %arg7: memref<8x256xf32, #tpu.memory_space<vmem>>, %arg8: memref<32x96xf32, #tpu.memory_space<vmem>>, %arg9: memref<32x32xf32, #tpu.memory_space<vmem>>, %arg10: memref<32x256xf32, #tpu.memory_space<vmem>>, %arg11: memref<256x32xf32, #tpu.memory_space<vmem>>, %arg12: memref<8x256xf32, #tpu.memory_space<vmem>>, %arg13: memref<1x8x32xf32, #tpu.memory_space<vmem>>) attributes {dimension_semantics = [#tpu.dimension_semantics<parallel>], iteration_bounds = array<i64: 2>, scalar_prefetch = 0 : i64, scratch_operands = 0 : i64, tpu.core_type = #tpu.core_type<tc>, window_params = [{transform_indices = @transform_0, window_bounds = array<i64: 1, 8, 32>}, {pipeline_mode = #tpu.pipeline_mode<synchronous>, transform_indices = @transform_1, window_bounds = array<i64: 8, 32>}, {pipeline_mode = #tpu.pipeline_mode<synchronous>, transform_indices = @transform_2, window_bounds = array<i64: 32, 96>}, {pipeline_mode = #tpu.pipeline_mode<synchronous>, transform_indices = @transform_3, window_bounds = array<i64: 32, 32>}, {pipeline_mode = #tpu.pipeline_mode<synchronous>, transform_indices = @transform_4, window_bounds = array<i64: 32, 256>}, {pipeline_mode = #tpu.pipeline_mode<synchronous>, transform_indices = @transform_5, window_bounds = array<i64: 256, 32>}, {pipeline_mode = #tpu.pipeline_mode<synchronous>, transform_indices = @transform_6, window_bounds = array<i64: 8, 256>}, {pipeline_mode = #tpu.pipeline_mode<synchronous>, transform_indices = @transform_7, window_bounds = array<i64: 32, 96>}, {pipeline_mode = #tpu.pipeline_mode<synchronous>, transform_indices = @transform_8, window_bounds = array<i64: 32, 32>}, {pipeline_mode = #tpu.pipeline_mode<synchronous>, transform_indices = @transform_9, window_bounds = array<i64: 32, 256>}, {pipeline_mode = #tpu.pipeline_mode<synchronous>, transform_indices = @transform_10, window_bounds = array<i64: 256, 32>}, {pipeline_mode = #tpu.pipeline_mode<synchronous>, transform_indices = @transform_11, window_bounds = array<i64: 8, 256>}, {transform_indices = @transform_12, window_bounds = array<i64: 1, 8, 32>}]} {
    %c0 = arith.constant 0 : index
    %c0_0 = arith.constant 0 : index
    %c0_1 = arith.constant 0 : index
    %0 = vector.load %arg1[%c0, %c0_0, %c0_1] : memref<1x8x32xf32, #tpu.memory_space<vmem>>, vector<1x8x32xf32>
    %1 = vector.shape_cast %0 : vector<1x8x32xf32> to vector<8x32xf32>
    %c0_2 = arith.constant 0 : index
    %c0_3 = arith.constant 0 : index
    %2 = vector.load %arg2[%c0_2, %c0_3] : memref<8x32xf32, #tpu.memory_space<vmem>>, vector<8x32xf32>
    %3 = arith.addf %1, %2 : vector<8x32xf32>
    %c0_4 = arith.constant 0 : index
    %c0_5 = arith.constant 0 : index
    %4 = vector.load %arg7[%c0_4, %c0_5] : memref<8x256xf32, #tpu.memory_space<vmem>>, vector<8x256xf32>
    %5 = vector.extract_strided_slice %4 {offsets = [0, 0], sizes = [1, 96], strides = [1, 1]} : vector<8x256xf32> to vector<1x96xf32>
    %6 = vector.extract_strided_slice %4 {offsets = [1, 0], sizes = [1, 256], strides = [1, 1]} : vector<8x256xf32> to vector<1x256xf32>
    %7 = vector.extract_strided_slice %4 {offsets = [2, 0], sizes = [1, 32], strides = [1, 1]} : vector<8x256xf32> to vector<1x32xf32>
    %8 = vector.extract_strided_slice %4 {offsets = [3, 0], sizes = [1, 32], strides = [1, 1]} : vector<8x256xf32> to vector<1x32xf32>
    %9 = vector.extract_strided_slice %4 {offsets = [4, 0], sizes = [1, 32], strides = [1, 1]} : vector<8x256xf32> to vector<1x32xf32>
    %10 = vector.extract_strided_slice %4 {offsets = [5, 0], sizes = [1, 32], strides = [1, 1]} : vector<8x256xf32> to vector<1x32xf32>
    %c0_6 = arith.constant 0 : index
    %c0_7 = arith.constant 0 : index
    %11 = vector.load %arg3[%c0_6, %c0_7] : memref<32x96xf32, #tpu.memory_space<vmem>>, vector<32x96xf32>
    %cst = arith.constant dense<0.000000e+00> : vector<8x96xf32>
    %12 = tpu.matmul %3, %11, %cst {dimension_numbers = #tpu.dot_dimension_numbers<[1], [0], [0], [1], [0, 0, 1, 1], [], []>} : vector<8x32xf32>, vector<32x96xf32>, vector<8x96xf32> -> vector<8x96xf32>
    %13 = vector.broadcast %5 : vector<1x96xf32> to vector<8x96xf32>
    %14 = arith.addf %12, %13 : vector<8x96xf32>
    %15 = vector.extract_strided_slice %14 {offsets = [0, 0], sizes = [8, 32], strides = [1, 1]} : vector<8x96xf32> to vector<8x32xf32>
    %16 = vector.extract_strided_slice %14 {offsets = [0, 32], sizes = [8, 32], strides = [1, 1]} : vector<8x96xf32> to vector<8x32xf32>
    %17 = vector.extract_strided_slice %14 {offsets = [0, 64], sizes = [8, 32], strides = [1, 1]} : vector<8x96xf32> to vector<8x32xf32>
    %18 = vector.extract_strided_slice %15 {offsets = [0, 0], sizes = [8, 8], strides = [1, 1]} : vector<8x32xf32> to vector<8x8xf32>
    %19 = vector.extract_strided_slice %16 {offsets = [0, 0], sizes = [8, 8], strides = [1, 1]} : vector<8x32xf32> to vector<8x8xf32>
    %20 = vector.extract_strided_slice %17 {offsets = [0, 0], sizes = [8, 8], strides = [1, 1]} : vector<8x32xf32> to vector<8x8xf32>
    %cst_8 = arith.constant dense<0.000000e+00> : vector<8x8xf32>
    %21 = tpu.matmul %18, %19, %cst_8 {dimension_numbers = #tpu.dot_dimension_numbers<[1], [1], [0], [0], [0, 0, 1, 0], [], []>} : vector<8x8xf32>, vector<8x8xf32>, vector<8x8xf32> -> vector<8x8xf32>
    %cst_9 = arith.constant 0.353553385 : f32
    %22 = vector.broadcast %cst_9 : f32 to vector<8x8xf32>
    %23 = arith.mulf %21, %22 : vector<8x8xf32>
    %cst_10 = arith.constant dense<0xFF800000> : vector<8xf32>
    %24 = vector.multi_reduction <maximumf>, %23, %cst_10 [1] : vector<8x8xf32> to vector<8xf32>
    %25 = vector.shape_cast %24 : vector<8xf32> to vector<8x1xf32>
    %26 = vector.broadcast %25 : vector<8x1xf32> to vector<8x8xf32>
    %27 = arith.subf %23, %26 : vector<8x8xf32>
    %28 = math.exp %27 : vector<8x8xf32>
    %cst_11 = arith.constant dense<0.000000e+00> : vector<8xf32>
    %29 = vector.multi_reduction <add>, %28, %cst_11 [1] : vector<8x8xf32> to vector<8xf32>
    %30 = vector.shape_cast %29 : vector<8xf32> to vector<8x1xf32>
    %31 = vector.broadcast %30 : vector<8x1xf32> to vector<8x8xf32>
    %32 = arith.divf %28, %31 : vector<8x8xf32>
    %cst_12 = arith.constant 0.000000e+00 : f32
    %33 = vector.broadcast %cst_12 : f32 to vector<8x8xf32>
    %34 = arith.cmpf ogt, %23, %33 : vector<8x8xf32>
    %cst_13 = arith.constant 0.000000e+00 : f32
    %35 = vector.broadcast %cst_13 : f32 to vector<8x8xf32>
    %36 = arith.select %34, %32, %35 : vector<8x8xi1>, vector<8x8xf32>
    %cst_14 = arith.constant dense<0.000000e+00> : vector<8x8xf32>
    %37 = tpu.matmul %36, %20, %cst_14 {dimension_numbers = #tpu.dot_dimension_numbers<[1], [0], [0], [1], [0, 0, 1, 1], [], []>} : vector<8x8xf32>, vector<8x8xf32>, vector<8x8xf32> -> vector<8x8xf32>
    %c0_15 = arith.constant 0 : index
    %c0_16 = arith.constant 0 : index
    %38 = vector.load %arg4[%c0_15, %c0_16] : memref<32x32xf32, #tpu.memory_space<vmem>>, vector<8x32xf32>
    %cst_17 = arith.constant dense<0.000000e+00> : vector<8x32xf32>
    %39 = tpu.matmul %37, %38, %cst_17 {dimension_numbers = #tpu.dot_dimension_numbers<[1], [0], [0], [1], [0, 0, 1, 1], [], []>} : vector<8x8xf32>, vector<8x32xf32>, vector<8x32xf32> -> vector<8x32xf32>
    %40 = vector.extract_strided_slice %15 {offsets = [0, 8], sizes = [8, 8], strides = [1, 1]} : vector<8x32xf32> to vector<8x8xf32>
    %41 = vector.extract_strided_slice %16 {offsets = [0, 8], sizes = [8, 8], strides = [1, 1]} : vector<8x32xf32> to vector<8x8xf32>
    %42 = vector.extract_strided_slice %17 {offsets = [0, 8], sizes = [8, 8], strides = [1, 1]} : vector<8x32xf32> to vector<8x8xf32>
    %cst_18 = arith.constant dense<0.000000e+00> : vector<8x8xf32>
    %43 = tpu.matmul %40, %41, %cst_18 {dimension_numbers = #tpu.dot_dimension_numbers<[1], [1], [0], [0], [0, 0, 1, 0], [], []>} : vector<8x8xf32>, vector<8x8xf32>, vector<8x8xf32> -> vector<8x8xf32>
    %cst_19 = arith.constant 0.353553385 : f32
    %44 = vector.broadcast %cst_19 : f32 to vector<8x8xf32>
    %45 = arith.mulf %43, %44 : vector<8x8xf32>
    %cst_20 = arith.constant dense<0xFF800000> : vector<8xf32>
    %46 = vector.multi_reduction <maximumf>, %45, %cst_20 [1] : vector<8x8xf32> to vector<8xf32>
    %47 = vector.shape_cast %46 : vector<8xf32> to vector<8x1xf32>
    %48 = vector.broadcast %47 : vector<8x1xf32> to vector<8x8xf32>
    %49 = arith.subf %45, %48 : vector<8x8xf32>
    %50 = math.exp %49 : vector<8x8xf32>
    %cst_21 = arith.constant dense<0.000000e+00> : vector<8xf32>
    %51 = vector.multi_reduction <add>, %50, %cst_21 [1] : vector<8x8xf32> to vector<8xf32>
    %52 = vector.shape_cast %51 : vector<8xf32> to vector<8x1xf32>
    %53 = vector.broadcast %52 : vector<8x1xf32> to vector<8x8xf32>
    %54 = arith.divf %50, %53 : vector<8x8xf32>
    %cst_22 = arith.constant 0.000000e+00 : f32
    %55 = vector.broadcast %cst_22 : f32 to vector<8x8xf32>
    %56 = arith.cmpf ogt, %45, %55 : vector<8x8xf32>
    %cst_23 = arith.constant 0.000000e+00 : f32
    %57 = vector.broadcast %cst_23 : f32 to vector<8x8xf32>
    %58 = arith.select %56, %54, %57 : vector<8x8xi1>, vector<8x8xf32>
    %cst_24 = arith.constant dense<0.000000e+00> : vector<8x8xf32>
    %59 = tpu.matmul %58, %42, %cst_24 {dimension_numbers = #tpu.dot_dimension_numbers<[1], [0], [0], [1], [0, 0, 1, 1], [], []>} : vector<8x8xf32>, vector<8x8xf32>, vector<8x8xf32> -> vector<8x8xf32>
    %c8 = arith.constant 8 : index
    %c0_25 = arith.constant 0 : index
    %60 = vector.load %arg4[%c8, %c0_25] : memref<32x32xf32, #tpu.memory_space<vmem>>, vector<8x32xf32>
    %cst_26 = arith.constant dense<0.000000e+00> : vector<8x32xf32>
    %61 = tpu.matmul %59, %60, %cst_26 {dimension_numbers = #tpu.dot_dimension_numbers<[1], [0], [0], [1], [0, 0, 1, 1], [], []>} : vector<8x8xf32>, vector<8x32xf32>, vector<8x32xf32> -> vector<8x32xf32>
    %62 = arith.addf %39, %61 : vector<8x32xf32>
    %63 = vector.extract_strided_slice %15 {offsets = [0, 16], sizes = [8, 8], strides = [1, 1]} : vector<8x32xf32> to vector<8x8xf32>
    %64 = vector.extract_strided_slice %16 {offsets = [0, 16], sizes = [8, 8], strides = [1, 1]} : vector<8x32xf32> to vector<8x8xf32>
    %65 = vector.extract_strided_slice %17 {offsets = [0, 16], sizes = [8, 8], strides = [1, 1]} : vector<8x32xf32> to vector<8x8xf32>
    %cst_27 = arith.constant dense<0.000000e+00> : vector<8x8xf32>
    %66 = tpu.matmul %63, %64, %cst_27 {dimension_numbers = #tpu.dot_dimension_numbers<[1], [1], [0], [0], [0, 0, 1, 0], [], []>} : vector<8x8xf32>, vector<8x8xf32>, vector<8x8xf32> -> vector<8x8xf32>
    %cst_28 = arith.constant 0.353553385 : f32
    %67 = vector.broadcast %cst_28 : f32 to vector<8x8xf32>
    %68 = arith.mulf %66, %67 : vector<8x8xf32>
    %cst_29 = arith.constant dense<0xFF800000> : vector<8xf32>
    %69 = vector.multi_reduction <maximumf>, %68, %cst_29 [1] : vector<8x8xf32> to vector<8xf32>
    %70 = vector.shape_cast %69 : vector<8xf32> to vector<8x1xf32>
    %71 = vector.broadcast %70 : vector<8x1xf32> to vector<8x8xf32>
    %72 = arith.subf %68, %71 : vector<8x8xf32>
    %73 = math.exp %72 : vector<8x8xf32>
    %cst_30 = arith.constant dense<0.000000e+00> : vector<8xf32>
    %74 = vector.multi_reduction <add>, %73, %cst_30 [1] : vector<8x8xf32> to vector<8xf32>
    %75 = vector.shape_cast %74 : vector<8xf32> to vector<8x1xf32>
    %76 = vector.broadcast %75 : vector<8x1xf32> to vector<8x8xf32>
    %77 = arith.divf %73, %76 : vector<8x8xf32>
    %cst_31 = arith.constant 0.000000e+00 : f32
    %78 = vector.broadcast %cst_31 : f32 to vector<8x8xf32>
    %79 = arith.cmpf ogt, %68, %78 : vector<8x8xf32>
    %cst_32 = arith.constant 0.000000e+00 : f32
    %80 = vector.broadcast %cst_32 : f32 to vector<8x8xf32>
    %81 = arith.select %79, %77, %80 : vector<8x8xi1>, vector<8x8xf32>
    %cst_33 = arith.constant dense<0.000000e+00> : vector<8x8xf32>
    %82 = tpu.matmul %81, %65, %cst_33 {dimension_numbers = #tpu.dot_dimension_numbers<[1], [0], [0], [1], [0, 0, 1, 1], [], []>} : vector<8x8xf32>, vector<8x8xf32>, vector<8x8xf32> -> vector<8x8xf32>
    %c16 = arith.constant 16 : index
    %c0_34 = arith.constant 0 : index
    %83 = vector.load %arg4[%c16, %c0_34] : memref<32x32xf32, #tpu.memory_space<vmem>>, vector<8x32xf32>
    %cst_35 = arith.constant dense<0.000000e+00> : vector<8x32xf32>
    %84 = tpu.matmul %82, %83, %cst_35 {dimension_numbers = #tpu.dot_dimension_numbers<[1], [0], [0], [1], [0, 0, 1, 1], [], []>} : vector<8x8xf32>, vector<8x32xf32>, vector<8x32xf32> -> vector<8x32xf32>
    %85 = arith.addf %62, %84 : vector<8x32xf32>
    %86 = vector.extract_strided_slice %15 {offsets = [0, 24], sizes = [8, 8], strides = [1, 1]} : vector<8x32xf32> to vector<8x8xf32>
    %87 = vector.extract_strided_slice %16 {offsets = [0, 24], sizes = [8, 8], strides = [1, 1]} : vector<8x32xf32> to vector<8x8xf32>
    %88 = vector.extract_strided_slice %17 {offsets = [0, 24], sizes = [8, 8], strides = [1, 1]} : vector<8x32xf32> to vector<8x8xf32>
    %cst_36 = arith.constant dense<0.000000e+00> : vector<8x8xf32>
    %89 = tpu.matmul %86, %87, %cst_36 {dimension_numbers = #tpu.dot_dimension_numbers<[1], [1], [0], [0], [0, 0, 1, 0], [], []>} : vector<8x8xf32>, vector<8x8xf32>, vector<8x8xf32> -> vector<8x8xf32>
    %cst_37 = arith.constant 0.353553385 : f32
    %90 = vector.broadcast %cst_37 : f32 to vector<8x8xf32>
    %91 = arith.mulf %89, %90 : vector<8x8xf32>
    %cst_38 = arith.constant dense<0xFF800000> : vector<8xf32>
    %92 = vector.multi_reduction <maximumf>, %91, %cst_38 [1] : vector<8x8xf32> to vector<8xf32>
    %93 = vector.shape_cast %92 : vector<8xf32> to vector<8x1xf32>
    %94 = vector.broadcast %93 : vector<8x1xf32> to vector<8x8xf32>
    %95 = arith.subf %91, %94 : vector<8x8xf32>
    %96 = math.exp %95 : vector<8x8xf32>
    %cst_39 = arith.constant dense<0.000000e+00> : vector<8xf32>
    %97 = vector.multi_reduction <add>, %96, %cst_39 [1] : vector<8x8xf32> to vector<8xf32>
    %98 = vector.shape_cast %97 : vector<8xf32> to vector<8x1xf32>
    %99 = vector.broadcast %98 : vector<8x1xf32> to vector<8x8xf32>
    %100 = arith.divf %96, %99 : vector<8x8xf32>
    %cst_40 = arith.constant 0.000000e+00 : f32
    %101 = vector.broadcast %cst_40 : f32 to vector<8x8xf32>
    %102 = arith.cmpf ogt, %91, %101 : vector<8x8xf32>
    %cst_41 = arith.constant 0.000000e+00 : f32
    %103 = vector.broadcast %cst_41 : f32 to vector<8x8xf32>
    %104 = arith.select %102, %100, %103 : vector<8x8xi1>, vector<8x8xf32>
    %cst_42 = arith.constant dense<0.000000e+00> : vector<8x8xf32>
    %105 = tpu.matmul %104, %88, %cst_42 {dimension_numbers = #tpu.dot_dimension_numbers<[1], [0], [0], [1], [0, 0, 1, 1], [], []>} : vector<8x8xf32>, vector<8x8xf32>, vector<8x8xf32> -> vector<8x8xf32>
    %c24 = arith.constant 24 : index
    %c0_43 = arith.constant 0 : index
    %106 = vector.load %arg4[%c24, %c0_43] : memref<32x32xf32, #tpu.memory_space<vmem>>, vector<8x32xf32>
    %cst_44 = arith.constant dense<0.000000e+00> : vector<8x32xf32>
    %107 = tpu.matmul %105, %106, %cst_44 {dimension_numbers = #tpu.dot_dimension_numbers<[1], [0], [0], [1], [0, 0, 1, 1], [], []>} : vector<8x8xf32>, vector<8x32xf32>, vector<8x32xf32> -> vector<8x32xf32>
    %108 = arith.addf %85, %107 : vector<8x32xf32>
    %109 = vector.broadcast %7 : vector<1x32xf32> to vector<8x32xf32>
    %110 = arith.addf %108, %109 : vector<8x32xf32>
    %cst_45 = arith.constant dense<0.000000e+00> : vector<8xf32>
    %111 = vector.multi_reduction <add>, %110, %cst_45 [1] : vector<8x32xf32> to vector<8xf32>
    %112 = vector.shape_cast %111 : vector<8xf32> to vector<8x1xf32>
    %cst_46 = arith.constant 3.200000e+01 : f32
    %113 = vector.broadcast %cst_46 : f32 to vector<8x1xf32>
    %114 = arith.divf %112, %113 : vector<8x1xf32>
    %115 = vector.broadcast %114 : vector<8x1xf32> to vector<8x32xf32>
    %116 = arith.subf %110, %115 : vector<8x32xf32>
    %117 = arith.mulf %116, %116 : vector<8x32xf32>
    %cst_47 = arith.constant dense<0.000000e+00> : vector<8xf32>
    %118 = vector.multi_reduction <add>, %117, %cst_47 [1] : vector<8x32xf32> to vector<8xf32>
    %119 = vector.shape_cast %118 : vector<8xf32> to vector<8x1xf32>
    %cst_48 = arith.constant 3.200000e+01 : f32
    %120 = vector.broadcast %cst_48 : f32 to vector<8x1xf32>
    %121 = arith.divf %119, %120 : vector<8x1xf32>
    %cst_49 = arith.constant 9.99999974E-6 : f32
    %122 = vector.broadcast %cst_49 : f32 to vector<8x1xf32>
    %123 = arith.addf %121, %122 : vector<8x1xf32>
    %124 = math.rsqrt %123 : vector<8x1xf32>
    %125 = vector.broadcast %124 : vector<8x1xf32> to vector<8x32xf32>
    %126 = arith.mulf %116, %125 : vector<8x32xf32>
    %127 = vector.broadcast %8 : vector<1x32xf32> to vector<8x32xf32>
    %128 = arith.mulf %126, %127 : vector<8x32xf32>
    %129 = vector.broadcast %9 : vector<1x32xf32> to vector<8x32xf32>
    %130 = arith.addf %128, %129 : vector<8x32xf32>
    %131 = arith.addf %3, %130 : vector<8x32xf32>
    %c0_50 = arith.constant 0 : index
    %c0_51 = arith.constant 0 : index
    %132 = vector.load %arg5[%c0_50, %c0_51] : memref<32x256xf32, #tpu.memory_space<vmem>>, vector<32x256xf32>
    %cst_52 = arith.constant dense<0.000000e+00> : vector<8x256xf32>
    %133 = tpu.matmul %131, %132, %cst_52 {dimension_numbers = #tpu.dot_dimension_numbers<[1], [0], [0], [1], [0, 0, 1, 1], [], []>} : vector<8x32xf32>, vector<32x256xf32>, vector<8x256xf32> -> vector<8x256xf32>
    %134 = vector.broadcast %6 : vector<1x256xf32> to vector<8x256xf32>
    %135 = arith.addf %133, %134 : vector<8x256xf32>
    %cst_53 = arith.constant 5.000000e-01 : f32
    %136 = vector.broadcast %cst_53 : f32 to vector<8x256xf32>
    %137 = arith.mulf %136, %135 : vector<8x256xf32>
    %cst_54 = arith.constant 0.707106769 : f32
    %138 = vector.broadcast %cst_54 : f32 to vector<8x256xf32>
    %139 = arith.mulf %135, %138 : vector<8x256xf32>
    %cst_55 = arith.constant 0.000000e+00 : f32
    %140 = vector.broadcast %cst_55 : f32 to vector<8x256xf32>
    %141 = arith.cmpf oge, %139, %140 : vector<8x256xf32>
    %cst_56 = arith.constant 1.000000e+00 : f32
    %cst_57 = arith.constant -1.000000e+00 : f32
    %142 = vector.broadcast %cst_56 : f32 to vector<8x256xf32>
    %143 = vector.broadcast %cst_57 : f32 to vector<8x256xf32>
    %144 = arith.select %141, %142, %143 : vector<8x256xi1>, vector<8x256xf32>
    %145 = math.absf %139 : vector<8x256xf32>
    %cst_58 = arith.constant 0.327591091 : f32
    %146 = vector.broadcast %cst_58 : f32 to vector<8x256xf32>
    %147 = arith.mulf %146, %145 : vector<8x256xf32>
    %cst_59 = arith.constant 1.000000e+00 : f32
    %148 = vector.broadcast %cst_59 : f32 to vector<8x256xf32>
    %149 = arith.addf %148, %147 : vector<8x256xf32>
    %cst_60 = arith.constant 1.000000e+00 : f32
    %150 = vector.broadcast %cst_60 : f32 to vector<8x256xf32>
    %151 = arith.divf %150, %149 : vector<8x256xf32>
    %cst_61 = arith.constant 1.06140542 : f32
    %152 = vector.broadcast %cst_61 : f32 to vector<8x256xf32>
    %153 = arith.mulf %152, %151 : vector<8x256xf32>
    %cst_62 = arith.constant -1.45315206 : f32
    %154 = vector.broadcast %cst_62 : f32 to vector<8x256xf32>
    %155 = arith.addf %153, %154 : vector<8x256xf32>
    %156 = arith.mulf %155, %151 : vector<8x256xf32>
    %cst_63 = arith.constant 1.42141378 : f32
    %157 = vector.broadcast %cst_63 : f32 to vector<8x256xf32>
    %158 = arith.addf %156, %157 : vector<8x256xf32>
    %159 = arith.mulf %158, %151 : vector<8x256xf32>
    %cst_64 = arith.constant -0.284496725 : f32
    %160 = vector.broadcast %cst_64 : f32 to vector<8x256xf32>
    %161 = arith.addf %159, %160 : vector<8x256xf32>
    %162 = arith.mulf %161, %151 : vector<8x256xf32>
    %cst_65 = arith.constant 0.254829586 : f32
    %163 = vector.broadcast %cst_65 : f32 to vector<8x256xf32>
    %164 = arith.addf %162, %163 : vector<8x256xf32>
    %165 = arith.mulf %164, %151 : vector<8x256xf32>
    %cst_66 = arith.constant 0.000000e+00 : f32
    %166 = vector.broadcast %cst_66 : f32 to vector<8x256xf32>
    %167 = arith.subf %166, %145 : vector<8x256xf32>
    %168 = arith.mulf %167, %145 : vector<8x256xf32>
    %169 = math.exp %168 : vector<8x256xf32>
    %170 = arith.mulf %165, %169 : vector<8x256xf32>
    %cst_67 = arith.constant 1.000000e+00 : f32
    %171 = vector.broadcast %cst_67 : f32 to vector<8x256xf32>
    %172 = arith.subf %171, %170 : vector<8x256xf32>
    %173 = arith.mulf %144, %172 : vector<8x256xf32>
    %cst_68 = arith.constant 1.000000e+00 : f32
    %174 = vector.broadcast %cst_68 : f32 to vector<8x256xf32>
    %175 = arith.addf %174, %173 : vector<8x256xf32>
    %176 = arith.mulf %137, %175 : vector<8x256xf32>
    %c0_69 = arith.constant 0 : index
    %c0_70 = arith.constant 0 : index
    %177 = vector.load %arg6[%c0_69, %c0_70] : memref<256x32xf32, #tpu.memory_space<vmem>>, vector<256x32xf32>
    %cst_71 = arith.constant dense<0.000000e+00> : vector<8x32xf32>
    %178 = tpu.matmul %176, %177, %cst_71 {dimension_numbers = #tpu.dot_dimension_numbers<[1], [0], [0], [1], [0, 0, 1, 1], [], []>} : vector<8x256xf32>, vector<256x32xf32>, vector<8x32xf32> -> vector<8x32xf32>
    %179 = vector.broadcast %10 : vector<1x32xf32> to vector<8x32xf32>
    %180 = arith.addf %178, %179 : vector<8x32xf32>
    %cst_72 = arith.constant dense<0.000000e+00> : vector<8xf32>
    %181 = vector.multi_reduction <add>, %180, %cst_72 [1] : vector<8x32xf32> to vector<8xf32>
    %182 = vector.shape_cast %181 : vector<8xf32> to vector<8x1xf32>
    %cst_73 = arith.constant 3.200000e+01 : f32
    %183 = vector.broadcast %cst_73 : f32 to vector<8x1xf32>
    %184 = arith.divf %182, %183 : vector<8x1xf32>
    %185 = vector.broadcast %184 : vector<8x1xf32> to vector<8x32xf32>
    %186 = arith.subf %180, %185 : vector<8x32xf32>
    %187 = arith.mulf %186, %186 : vector<8x32xf32>
    %cst_74 = arith.constant dense<0.000000e+00> : vector<8xf32>
    %188 = vector.multi_reduction <add>, %187, %cst_74 [1] : vector<8x32xf32> to vector<8xf32>
    %189 = vector.shape_cast %188 : vector<8xf32> to vector<8x1xf32>
    %cst_75 = arith.constant 3.200000e+01 : f32
    %190 = vector.broadcast %cst_75 : f32 to vector<8x1xf32>
    %191 = arith.divf %189, %190 : vector<8x1xf32>
    %cst_76 = arith.constant 9.99999974E-6 : f32
    %192 = vector.broadcast %cst_76 : f32 to vector<8x1xf32>
    %193 = arith.addf %191, %192 : vector<8x1xf32>
    %194 = math.rsqrt %193 : vector<8x1xf32>
    %195 = vector.broadcast %194 : vector<8x1xf32> to vector<8x32xf32>
    %196 = arith.mulf %186, %195 : vector<8x32xf32>
    %197 = vector.broadcast %8 : vector<1x32xf32> to vector<8x32xf32>
    %198 = arith.mulf %196, %197 : vector<8x32xf32>
    %199 = vector.broadcast %9 : vector<1x32xf32> to vector<8x32xf32>
    %200 = arith.addf %198, %199 : vector<8x32xf32>
    %201 = arith.addf %131, %200 : vector<8x32xf32>
    %c0_77 = arith.constant 0 : index
    %c0_78 = arith.constant 0 : index
    %202 = vector.load %arg12[%c0_77, %c0_78] : memref<8x256xf32, #tpu.memory_space<vmem>>, vector<8x256xf32>
    %203 = vector.extract_strided_slice %202 {offsets = [0, 0], sizes = [1, 96], strides = [1, 1]} : vector<8x256xf32> to vector<1x96xf32>
    %204 = vector.extract_strided_slice %202 {offsets = [1, 0], sizes = [1, 256], strides = [1, 1]} : vector<8x256xf32> to vector<1x256xf32>
    %205 = vector.extract_strided_slice %202 {offsets = [2, 0], sizes = [1, 32], strides = [1, 1]} : vector<8x256xf32> to vector<1x32xf32>
    %206 = vector.extract_strided_slice %202 {offsets = [3, 0], sizes = [1, 32], strides = [1, 1]} : vector<8x256xf32> to vector<1x32xf32>
    %207 = vector.extract_strided_slice %202 {offsets = [4, 0], sizes = [1, 32], strides = [1, 1]} : vector<8x256xf32> to vector<1x32xf32>
    %208 = vector.extract_strided_slice %202 {offsets = [5, 0], sizes = [1, 32], strides = [1, 1]} : vector<8x256xf32> to vector<1x32xf32>
    %c0_79 = arith.constant 0 : index
    %c0_80 = arith.constant 0 : index
    %209 = vector.load %arg8[%c0_79, %c0_80] : memref<32x96xf32, #tpu.memory_space<vmem>>, vector<32x96xf32>
    %cst_81 = arith.constant dense<0.000000e+00> : vector<8x96xf32>
    %210 = tpu.matmul %201, %209, %cst_81 {dimension_numbers = #tpu.dot_dimension_numbers<[1], [0], [0], [1], [0, 0, 1, 1], [], []>} : vector<8x32xf32>, vector<32x96xf32>, vector<8x96xf32> -> vector<8x96xf32>
    %211 = vector.broadcast %203 : vector<1x96xf32> to vector<8x96xf32>
    %212 = arith.addf %210, %211 : vector<8x96xf32>
    %213 = vector.extract_strided_slice %212 {offsets = [0, 0], sizes = [8, 32], strides = [1, 1]} : vector<8x96xf32> to vector<8x32xf32>
    %214 = vector.extract_strided_slice %212 {offsets = [0, 32], sizes = [8, 32], strides = [1, 1]} : vector<8x96xf32> to vector<8x32xf32>
    %215 = vector.extract_strided_slice %212 {offsets = [0, 64], sizes = [8, 32], strides = [1, 1]} : vector<8x96xf32> to vector<8x32xf32>
    %216 = vector.extract_strided_slice %213 {offsets = [0, 0], sizes = [8, 8], strides = [1, 1]} : vector<8x32xf32> to vector<8x8xf32>
    %217 = vector.extract_strided_slice %214 {offsets = [0, 0], sizes = [8, 8], strides = [1, 1]} : vector<8x32xf32> to vector<8x8xf32>
    %218 = vector.extract_strided_slice %215 {offsets = [0, 0], sizes = [8, 8], strides = [1, 1]} : vector<8x32xf32> to vector<8x8xf32>
    %cst_82 = arith.constant dense<0.000000e+00> : vector<8x8xf32>
    %219 = tpu.matmul %216, %217, %cst_82 {dimension_numbers = #tpu.dot_dimension_numbers<[1], [1], [0], [0], [0, 0, 1, 0], [], []>} : vector<8x8xf32>, vector<8x8xf32>, vector<8x8xf32> -> vector<8x8xf32>
    %cst_83 = arith.constant 0.353553385 : f32
    %220 = vector.broadcast %cst_83 : f32 to vector<8x8xf32>
    %221 = arith.mulf %219, %220 : vector<8x8xf32>
    %cst_84 = arith.constant dense<0xFF800000> : vector<8xf32>
    %222 = vector.multi_reduction <maximumf>, %221, %cst_84 [1] : vector<8x8xf32> to vector<8xf32>
    %223 = vector.shape_cast %222 : vector<8xf32> to vector<8x1xf32>
    %224 = vector.broadcast %223 : vector<8x1xf32> to vector<8x8xf32>
    %225 = arith.subf %221, %224 : vector<8x8xf32>
    %226 = math.exp %225 : vector<8x8xf32>
    %cst_85 = arith.constant dense<0.000000e+00> : vector<8xf32>
    %227 = vector.multi_reduction <add>, %226, %cst_85 [1] : vector<8x8xf32> to vector<8xf32>
    %228 = vector.shape_cast %227 : vector<8xf32> to vector<8x1xf32>
    %229 = vector.broadcast %228 : vector<8x1xf32> to vector<8x8xf32>
    %230 = arith.divf %226, %229 : vector<8x8xf32>
    %cst_86 = arith.constant 0.000000e+00 : f32
    %231 = vector.broadcast %cst_86 : f32 to vector<8x8xf32>
    %232 = arith.cmpf ogt, %221, %231 : vector<8x8xf32>
    %cst_87 = arith.constant 0.000000e+00 : f32
    %233 = vector.broadcast %cst_87 : f32 to vector<8x8xf32>
    %234 = arith.select %232, %230, %233 : vector<8x8xi1>, vector<8x8xf32>
    %cst_88 = arith.constant dense<0.000000e+00> : vector<8x8xf32>
    %235 = tpu.matmul %234, %218, %cst_88 {dimension_numbers = #tpu.dot_dimension_numbers<[1], [0], [0], [1], [0, 0, 1, 1], [], []>} : vector<8x8xf32>, vector<8x8xf32>, vector<8x8xf32> -> vector<8x8xf32>
    %c0_89 = arith.constant 0 : index
    %c0_90 = arith.constant 0 : index
    %236 = vector.load %arg9[%c0_89, %c0_90] : memref<32x32xf32, #tpu.memory_space<vmem>>, vector<8x32xf32>
    %cst_91 = arith.constant dense<0.000000e+00> : vector<8x32xf32>
    %237 = tpu.matmul %235, %236, %cst_91 {dimension_numbers = #tpu.dot_dimension_numbers<[1], [0], [0], [1], [0, 0, 1, 1], [], []>} : vector<8x8xf32>, vector<8x32xf32>, vector<8x32xf32> -> vector<8x32xf32>
    %238 = vector.extract_strided_slice %213 {offsets = [0, 8], sizes = [8, 8], strides = [1, 1]} : vector<8x32xf32> to vector<8x8xf32>
    %239 = vector.extract_strided_slice %214 {offsets = [0, 8], sizes = [8, 8], strides = [1, 1]} : vector<8x32xf32> to vector<8x8xf32>
    %240 = vector.extract_strided_slice %215 {offsets = [0, 8], sizes = [8, 8], strides = [1, 1]} : vector<8x32xf32> to vector<8x8xf32>
    %cst_92 = arith.constant dense<0.000000e+00> : vector<8x8xf32>
    %241 = tpu.matmul %238, %239, %cst_92 {dimension_numbers = #tpu.dot_dimension_numbers<[1], [1], [0], [0], [0, 0, 1, 0], [], []>} : vector<8x8xf32>, vector<8x8xf32>, vector<8x8xf32> -> vector<8x8xf32>
    %cst_93 = arith.constant 0.353553385 : f32
    %242 = vector.broadcast %cst_93 : f32 to vector<8x8xf32>
    %243 = arith.mulf %241, %242 : vector<8x8xf32>
    %cst_94 = arith.constant dense<0xFF800000> : vector<8xf32>
    %244 = vector.multi_reduction <maximumf>, %243, %cst_94 [1] : vector<8x8xf32> to vector<8xf32>
    %245 = vector.shape_cast %244 : vector<8xf32> to vector<8x1xf32>
    %246 = vector.broadcast %245 : vector<8x1xf32> to vector<8x8xf32>
    %247 = arith.subf %243, %246 : vector<8x8xf32>
    %248 = math.exp %247 : vector<8x8xf32>
    %cst_95 = arith.constant dense<0.000000e+00> : vector<8xf32>
    %249 = vector.multi_reduction <add>, %248, %cst_95 [1] : vector<8x8xf32> to vector<8xf32>
    %250 = vector.shape_cast %249 : vector<8xf32> to vector<8x1xf32>
    %251 = vector.broadcast %250 : vector<8x1xf32> to vector<8x8xf32>
    %252 = arith.divf %248, %251 : vector<8x8xf32>
    %cst_96 = arith.constant 0.000000e+00 : f32
    %253 = vector.broadcast %cst_96 : f32 to vector<8x8xf32>
    %254 = arith.cmpf ogt, %243, %253 : vector<8x8xf32>
    %cst_97 = arith.constant 0.000000e+00 : f32
    %255 = vector.broadcast %cst_97 : f32 to vector<8x8xf32>
    %256 = arith.select %254, %252, %255 : vector<8x8xi1>, vector<8x8xf32>
    %cst_98 = arith.constant dense<0.000000e+00> : vector<8x8xf32>
    %257 = tpu.matmul %256, %240, %cst_98 {dimension_numbers = #tpu.dot_dimension_numbers<[1], [0], [0], [1], [0, 0, 1, 1], [], []>} : vector<8x8xf32>, vector<8x8xf32>, vector<8x8xf32> -> vector<8x8xf32>
    %c8_99 = arith.constant 8 : index
    %c0_100 = arith.constant 0 : index
    %258 = vector.load %arg9[%c8_99, %c0_100] : memref<32x32xf32, #tpu.memory_space<vmem>>, vector<8x32xf32>
    %cst_101 = arith.constant dense<0.000000e+00> : vector<8x32xf32>
    %259 = tpu.matmul %257, %258, %cst_101 {dimension_numbers = #tpu.dot_dimension_numbers<[1], [0], [0], [1], [0, 0, 1, 1], [], []>} : vector<8x8xf32>, vector<8x32xf32>, vector<8x32xf32> -> vector<8x32xf32>
    %260 = arith.addf %237, %259 : vector<8x32xf32>
    %261 = vector.extract_strided_slice %213 {offsets = [0, 16], sizes = [8, 8], strides = [1, 1]} : vector<8x32xf32> to vector<8x8xf32>
    %262 = vector.extract_strided_slice %214 {offsets = [0, 16], sizes = [8, 8], strides = [1, 1]} : vector<8x32xf32> to vector<8x8xf32>
    %263 = vector.extract_strided_slice %215 {offsets = [0, 16], sizes = [8, 8], strides = [1, 1]} : vector<8x32xf32> to vector<8x8xf32>
    %cst_102 = arith.constant dense<0.000000e+00> : vector<8x8xf32>
    %264 = tpu.matmul %261, %262, %cst_102 {dimension_numbers = #tpu.dot_dimension_numbers<[1], [1], [0], [0], [0, 0, 1, 0], [], []>} : vector<8x8xf32>, vector<8x8xf32>, vector<8x8xf32> -> vector<8x8xf32>
    %cst_103 = arith.constant 0.353553385 : f32
    %265 = vector.broadcast %cst_103 : f32 to vector<8x8xf32>
    %266 = arith.mulf %264, %265 : vector<8x8xf32>
    %cst_104 = arith.constant dense<0xFF800000> : vector<8xf32>
    %267 = vector.multi_reduction <maximumf>, %266, %cst_104 [1] : vector<8x8xf32> to vector<8xf32>
    %268 = vector.shape_cast %267 : vector<8xf32> to vector<8x1xf32>
    %269 = vector.broadcast %268 : vector<8x1xf32> to vector<8x8xf32>
    %270 = arith.subf %266, %269 : vector<8x8xf32>
    %271 = math.exp %270 : vector<8x8xf32>
    %cst_105 = arith.constant dense<0.000000e+00> : vector<8xf32>
    %272 = vector.multi_reduction <add>, %271, %cst_105 [1] : vector<8x8xf32> to vector<8xf32>
    %273 = vector.shape_cast %272 : vector<8xf32> to vector<8x1xf32>
    %274 = vector.broadcast %273 : vector<8x1xf32> to vector<8x8xf32>
    %275 = arith.divf %271, %274 : vector<8x8xf32>
    %cst_106 = arith.constant 0.000000e+00 : f32
    %276 = vector.broadcast %cst_106 : f32 to vector<8x8xf32>
    %277 = arith.cmpf ogt, %266, %276 : vector<8x8xf32>
    %cst_107 = arith.constant 0.000000e+00 : f32
    %278 = vector.broadcast %cst_107 : f32 to vector<8x8xf32>
    %279 = arith.select %277, %275, %278 : vector<8x8xi1>, vector<8x8xf32>
    %cst_108 = arith.constant dense<0.000000e+00> : vector<8x8xf32>
    %280 = tpu.matmul %279, %263, %cst_108 {dimension_numbers = #tpu.dot_dimension_numbers<[1], [0], [0], [1], [0, 0, 1, 1], [], []>} : vector<8x8xf32>, vector<8x8xf32>, vector<8x8xf32> -> vector<8x8xf32>
    %c16_109 = arith.constant 16 : index
    %c0_110 = arith.constant 0 : index
    %281 = vector.load %arg9[%c16_109, %c0_110] : memref<32x32xf32, #tpu.memory_space<vmem>>, vector<8x32xf32>
    %cst_111 = arith.constant dense<0.000000e+00> : vector<8x32xf32>
    %282 = tpu.matmul %280, %281, %cst_111 {dimension_numbers = #tpu.dot_dimension_numbers<[1], [0], [0], [1], [0, 0, 1, 1], [], []>} : vector<8x8xf32>, vector<8x32xf32>, vector<8x32xf32> -> vector<8x32xf32>
    %283 = arith.addf %260, %282 : vector<8x32xf32>
    %284 = vector.extract_strided_slice %213 {offsets = [0, 24], sizes = [8, 8], strides = [1, 1]} : vector<8x32xf32> to vector<8x8xf32>
    %285 = vector.extract_strided_slice %214 {offsets = [0, 24], sizes = [8, 8], strides = [1, 1]} : vector<8x32xf32> to vector<8x8xf32>
    %286 = vector.extract_strided_slice %215 {offsets = [0, 24], sizes = [8, 8], strides = [1, 1]} : vector<8x32xf32> to vector<8x8xf32>
    %cst_112 = arith.constant dense<0.000000e+00> : vector<8x8xf32>
    %287 = tpu.matmul %284, %285, %cst_112 {dimension_numbers = #tpu.dot_dimension_numbers<[1], [1], [0], [0], [0, 0, 1, 0], [], []>} : vector<8x8xf32>, vector<8x8xf32>, vector<8x8xf32> -> vector<8x8xf32>
    %cst_113 = arith.constant 0.353553385 : f32
    %288 = vector.broadcast %cst_113 : f32 to vector<8x8xf32>
    %289 = arith.mulf %287, %288 : vector<8x8xf32>
    %cst_114 = arith.constant dense<0xFF800000> : vector<8xf32>
    %290 = vector.multi_reduction <maximumf>, %289, %cst_114 [1] : vector<8x8xf32> to vector<8xf32>
    %291 = vector.shape_cast %290 : vector<8xf32> to vector<8x1xf32>
    %292 = vector.broadcast %291 : vector<8x1xf32> to vector<8x8xf32>
    %293 = arith.subf %289, %292 : vector<8x8xf32>
    %294 = math.exp %293 : vector<8x8xf32>
    %cst_115 = arith.constant dense<0.000000e+00> : vector<8xf32>
    %295 = vector.multi_reduction <add>, %294, %cst_115 [1] : vector<8x8xf32> to vector<8xf32>
    %296 = vector.shape_cast %295 : vector<8xf32> to vector<8x1xf32>
    %297 = vector.broadcast %296 : vector<8x1xf32> to vector<8x8xf32>
    %298 = arith.divf %294, %297 : vector<8x8xf32>
    %cst_116 = arith.constant 0.000000e+00 : f32
    %299 = vector.broadcast %cst_116 : f32 to vector<8x8xf32>
    %300 = arith.cmpf ogt, %289, %299 : vector<8x8xf32>
    %cst_117 = arith.constant 0.000000e+00 : f32
    %301 = vector.broadcast %cst_117 : f32 to vector<8x8xf32>
    %302 = arith.select %300, %298, %301 : vector<8x8xi1>, vector<8x8xf32>
    %cst_118 = arith.constant dense<0.000000e+00> : vector<8x8xf32>
    %303 = tpu.matmul %302, %286, %cst_118 {dimension_numbers = #tpu.dot_dimension_numbers<[1], [0], [0], [1], [0, 0, 1, 1], [], []>} : vector<8x8xf32>, vector<8x8xf32>, vector<8x8xf32> -> vector<8x8xf32>
    %c24_119 = arith.constant 24 : index
    %c0_120 = arith.constant 0 : index
    %304 = vector.load %arg9[%c24_119, %c0_120] : memref<32x32xf32, #tpu.memory_space<vmem>>, vector<8x32xf32>
    %cst_121 = arith.constant dense<0.000000e+00> : vector<8x32xf32>
    %305 = tpu.matmul %303, %304, %cst_121 {dimension_numbers = #tpu.dot_dimension_numbers<[1], [0], [0], [1], [0, 0, 1, 1], [], []>} : vector<8x8xf32>, vector<8x32xf32>, vector<8x32xf32> -> vector<8x32xf32>
    %306 = arith.addf %283, %305 : vector<8x32xf32>
    %307 = vector.broadcast %205 : vector<1x32xf32> to vector<8x32xf32>
    %308 = arith.addf %306, %307 : vector<8x32xf32>
    %cst_122 = arith.constant dense<0.000000e+00> : vector<8xf32>
    %309 = vector.multi_reduction <add>, %308, %cst_122 [1] : vector<8x32xf32> to vector<8xf32>
    %310 = vector.shape_cast %309 : vector<8xf32> to vector<8x1xf32>
    %cst_123 = arith.constant 3.200000e+01 : f32
    %311 = vector.broadcast %cst_123 : f32 to vector<8x1xf32>
    %312 = arith.divf %310, %311 : vector<8x1xf32>
    %313 = vector.broadcast %312 : vector<8x1xf32> to vector<8x32xf32>
    %314 = arith.subf %308, %313 : vector<8x32xf32>
    %315 = arith.mulf %314, %314 : vector<8x32xf32>
    %cst_124 = arith.constant dense<0.000000e+00> : vector<8xf32>
    %316 = vector.multi_reduction <add>, %315, %cst_124 [1] : vector<8x32xf32> to vector<8xf32>
    %317 = vector.shape_cast %316 : vector<8xf32> to vector<8x1xf32>
    %cst_125 = arith.constant 3.200000e+01 : f32
    %318 = vector.broadcast %cst_125 : f32 to vector<8x1xf32>
    %319 = arith.divf %317, %318 : vector<8x1xf32>
    %cst_126 = arith.constant 9.99999974E-6 : f32
    %320 = vector.broadcast %cst_126 : f32 to vector<8x1xf32>
    %321 = arith.addf %319, %320 : vector<8x1xf32>
    %322 = math.rsqrt %321 : vector<8x1xf32>
    %323 = vector.broadcast %322 : vector<8x1xf32> to vector<8x32xf32>
    %324 = arith.mulf %314, %323 : vector<8x32xf32>
    %325 = vector.broadcast %206 : vector<1x32xf32> to vector<8x32xf32>
    %326 = arith.mulf %324, %325 : vector<8x32xf32>
    %327 = vector.broadcast %207 : vector<1x32xf32> to vector<8x32xf32>
    %328 = arith.addf %326, %327 : vector<8x32xf32>
    %329 = arith.addf %201, %328 : vector<8x32xf32>
    %c0_127 = arith.constant 0 : index
    %c0_128 = arith.constant 0 : index
    %330 = vector.load %arg10[%c0_127, %c0_128] : memref<32x256xf32, #tpu.memory_space<vmem>>, vector<32x256xf32>
    %cst_129 = arith.constant dense<0.000000e+00> : vector<8x256xf32>
    %331 = tpu.matmul %329, %330, %cst_129 {dimension_numbers = #tpu.dot_dimension_numbers<[1], [0], [0], [1], [0, 0, 1, 1], [], []>} : vector<8x32xf32>, vector<32x256xf32>, vector<8x256xf32> -> vector<8x256xf32>
    %332 = vector.broadcast %204 : vector<1x256xf32> to vector<8x256xf32>
    %333 = arith.addf %331, %332 : vector<8x256xf32>
    %cst_130 = arith.constant 5.000000e-01 : f32
    %334 = vector.broadcast %cst_130 : f32 to vector<8x256xf32>
    %335 = arith.mulf %334, %333 : vector<8x256xf32>
    %cst_131 = arith.constant 0.707106769 : f32
    %336 = vector.broadcast %cst_131 : f32 to vector<8x256xf32>
    %337 = arith.mulf %333, %336 : vector<8x256xf32>
    %cst_132 = arith.constant 0.000000e+00 : f32
    %338 = vector.broadcast %cst_132 : f32 to vector<8x256xf32>
    %339 = arith.cmpf oge, %337, %338 : vector<8x256xf32>
    %cst_133 = arith.constant 1.000000e+00 : f32
    %cst_134 = arith.constant -1.000000e+00 : f32
    %340 = vector.broadcast %cst_133 : f32 to vector<8x256xf32>
    %341 = vector.broadcast %cst_134 : f32 to vector<8x256xf32>
    %342 = arith.select %339, %340, %341 : vector<8x256xi1>, vector<8x256xf32>
    %343 = math.absf %337 : vector<8x256xf32>
    %cst_135 = arith.constant 0.327591091 : f32
    %344 = vector.broadcast %cst_135 : f32 to vector<8x256xf32>
    %345 = arith.mulf %344, %343 : vector<8x256xf32>
    %cst_136 = arith.constant 1.000000e+00 : f32
    %346 = vector.broadcast %cst_136 : f32 to vector<8x256xf32>
    %347 = arith.addf %346, %345 : vector<8x256xf32>
    %cst_137 = arith.constant 1.000000e+00 : f32
    %348 = vector.broadcast %cst_137 : f32 to vector<8x256xf32>
    %349 = arith.divf %348, %347 : vector<8x256xf32>
    %cst_138 = arith.constant 1.06140542 : f32
    %350 = vector.broadcast %cst_138 : f32 to vector<8x256xf32>
    %351 = arith.mulf %350, %349 : vector<8x256xf32>
    %cst_139 = arith.constant -1.45315206 : f32
    %352 = vector.broadcast %cst_139 : f32 to vector<8x256xf32>
    %353 = arith.addf %351, %352 : vector<8x256xf32>
    %354 = arith.mulf %353, %349 : vector<8x256xf32>
    %cst_140 = arith.constant 1.42141378 : f32
    %355 = vector.broadcast %cst_140 : f32 to vector<8x256xf32>
    %356 = arith.addf %354, %355 : vector<8x256xf32>
    %357 = arith.mulf %356, %349 : vector<8x256xf32>
    %cst_141 = arith.constant -0.284496725 : f32
    %358 = vector.broadcast %cst_141 : f32 to vector<8x256xf32>
    %359 = arith.addf %357, %358 : vector<8x256xf32>
    %360 = arith.mulf %359, %349 : vector<8x256xf32>
    %cst_142 = arith.constant 0.254829586 : f32
    %361 = vector.broadcast %cst_142 : f32 to vector<8x256xf32>
    %362 = arith.addf %360, %361 : vector<8x256xf32>
    %363 = arith.mulf %362, %349 : vector<8x256xf32>
    %cst_143 = arith.constant 0.000000e+00 : f32
    %364 = vector.broadcast %cst_143 : f32 to vector<8x256xf32>
    %365 = arith.subf %364, %343 : vector<8x256xf32>
    %366 = arith.mulf %365, %343 : vector<8x256xf32>
    %367 = math.exp %366 : vector<8x256xf32>
    %368 = arith.mulf %363, %367 : vector<8x256xf32>
    %cst_144 = arith.constant 1.000000e+00 : f32
    %369 = vector.broadcast %cst_144 : f32 to vector<8x256xf32>
    %370 = arith.subf %369, %368 : vector<8x256xf32>
    %371 = arith.mulf %342, %370 : vector<8x256xf32>
    %cst_145 = arith.constant 1.000000e+00 : f32
    %372 = vector.broadcast %cst_145 : f32 to vector<8x256xf32>
    %373 = arith.addf %372, %371 : vector<8x256xf32>
    %374 = arith.mulf %335, %373 : vector<8x256xf32>
    %c0_146 = arith.constant 0 : index
    %c0_147 = arith.constant 0 : index
    %375 = vector.load %arg11[%c0_146, %c0_147] : memref<256x32xf32, #tpu.memory_space<vmem>>, vector<256x32xf32>
    %cst_148 = arith.constant dense<0.000000e+00> : vector<8x32xf32>
    %376 = tpu.matmul %374, %375, %cst_148 {dimension_numbers = #tpu.dot_dimension_numbers<[1], [0], [0], [1], [0, 0, 1, 1], [], []>} : vector<8x256xf32>, vector<256x32xf32>, vector<8x32xf32> -> vector<8x32xf32>
    %377 = vector.broadcast %208 : vector<1x32xf32> to vector<8x32xf32>
    %378 = arith.addf %376, %377 : vector<8x32xf32>
    %cst_149 = arith.constant dense<0.000000e+00> : vector<8xf32>
    %379 = vector.multi_reduction <add>, %378, %cst_149 [1] : vector<8x32xf32> to vector<8xf32>
    %380 = vector.shape_cast %379 : vector<8xf32> to vector<8x1xf32>
    %cst_150 = arith.constant 3.200000e+01 : f32
    %381 = vector.broadcast %cst_150 : f32 to vector<8x1xf32>
    %382 = arith.divf %380, %381 : vector<8x1xf32>
    %383 = vector.broadcast %382 : vector<8x1xf32> to vector<8x32xf32>
    %384 = arith.subf %378, %383 : vector<8x32xf32>
    %385 = arith.mulf %384, %384 : vector<8x32xf32>
    %cst_151 = arith.constant dense<0.000000e+00> : vector<8xf32>
    %386 = vector.multi_reduction <add>, %385, %cst_151 [1] : vector<8x32xf32> to vector<8xf32>
    %387 = vector.shape_cast %386 : vector<8xf32> to vector<8x1xf32>
    %cst_152 = arith.constant 3.200000e+01 : f32
    %388 = vector.broadcast %cst_152 : f32 to vector<8x1xf32>
    %389 = arith.divf %387, %388 : vector<8x1xf32>
    %cst_153 = arith.constant 9.99999974E-6 : f32
    %390 = vector.broadcast %cst_153 : f32 to vector<8x1xf32>
    %391 = arith.addf %389, %390 : vector<8x1xf32>
    %392 = math.rsqrt %391 : vector<8x1xf32>
    %393 = vector.broadcast %392 : vector<8x1xf32> to vector<8x32xf32>
    %394 = arith.mulf %384, %393 : vector<8x32xf32>
    %395 = vector.broadcast %206 : vector<1x32xf32> to vector<8x32xf32>
    %396 = arith.mulf %394, %395 : vector<8x32xf32>
    %397 = vector.broadcast %207 : vector<1x32xf32> to vector<8x32xf32>
    %398 = arith.addf %396, %397 : vector<8x32xf32>
    %399 = arith.addf %329, %398 : vector<8x32xf32>
    %c0_154 = arith.constant 0 : index
    %c0_155 = arith.constant 0 : index
    %c0_156 = arith.constant 0 : index
    %400 = vector.load %arg13[%c0_154, %c0_155, %c0_156] : memref<1x8x32xf32, #tpu.memory_space<vmem>>, vector<1x8x32xf32>
    %401 = vector.shape_cast %400 : vector<1x8x32xf32> to vector<8x32xf32>
    %402 = vector.shape_cast %399 : vector<8x32xf32> to vector<1x8x32xf32>
    tpu.vector_store %arg13[%c0_154, %c0_155, %c0_156], %402 {strides = array<i32>} : memref<1x8x32xf32, #tpu.memory_space<vmem>>, vector<1x8x32xf32>,
    return
  }
  func.func @transform_0(%arg0: i32) -> (i32, i32, i32) {
    %c0_i32 = arith.constant 0 : i32
    %c0_i32_0 = arith.constant 0 : i32
    %c0_i32_1 = arith.constant 0 : i32
    return %arg0, %c0_i32, %c0_i32_0 : i32, i32, i32
  }
  func.func @transform_1(%arg0: i32) -> (i32, i32) {
    %c0_i32 = arith.constant 0 : i32
    %c0_i32_0 = arith.constant 0 : i32
    %c0_i32_1 = arith.constant 0 : i32
    return %c0_i32, %c0_i32_0 : i32, i32
  }
  func.func @transform_2(%arg0: i32) -> (i32, i32) {
    %c0_i32 = arith.constant 0 : i32
    %c0_i32_0 = arith.constant 0 : i32
    %c0_i32_1 = arith.constant 0 : i32
    return %c0_i32, %c0_i32_0 : i32, i32
  }
  func.func @transform_3(%arg0: i32) -> (i32, i32) {
    %c0_i32 = arith.constant 0 : i32
    %c0_i32_0 = arith.constant 0 : i32
    %c0_i32_1 = arith.constant 0 : i32
    return %c0_i32, %c0_i32_0 : i32, i32
  }
  func.func @transform_4(%arg0: i32) -> (i32, i32) {
    %c0_i32 = arith.constant 0 : i32
    %c0_i32_0 = arith.constant 0 : i32
    %c0_i32_1 = arith.constant 0 : i32
    return %c0_i32, %c0_i32_0 : i32, i32
  }
  func.func @transform_5(%arg0: i32) -> (i32, i32) {
    %c0_i32 = arith.constant 0 : i32
    %c0_i32_0 = arith.constant 0 : i32
    %c0_i32_1 = arith.constant 0 : i32
    return %c0_i32, %c0_i32_0 : i32, i32
  }
  func.func @transform_6(%arg0: i32) -> (i32, i32) {
    %c0_i32 = arith.constant 0 : i32
    %c0_i32_0 = arith.constant 0 : i32
    %c0_i32_1 = arith.constant 0 : i32
    return %c0_i32, %c0_i32_0 : i32, i32
  }
  func.func @transform_7(%arg0: i32) -> (i32, i32) {
    %c0_i32 = arith.constant 0 : i32
    %c0_i32_0 = arith.constant 0 : i32
    %c0_i32_1 = arith.constant 0 : i32
    return %c0_i32, %c0_i32_0 : i32, i32
  }
  func.func @transform_8(%arg0: i32) -> (i32, i32) {
    %c0_i32 = arith.constant 0 : i32
    %c0_i32_0 = arith.constant 0 : i32
    %c0_i32_1 = arith.constant 0 : i32
    return %c0_i32, %c0_i32_0 : i32, i32
  }
  func.func @transform_9(%arg0: i32) -> (i32, i32) {
    %c0_i32 = arith.constant 0 : i32
    %c0_i32_0 = arith.constant 0 : i32
    %c0_i32_1 = arith.constant 0 : i32
    return %c0_i32, %c0_i32_0 : i32, i32
  }
  func.func @transform_10(%arg0: i32) -> (i32, i32) {
    %c0_i32 = arith.constant 0 : i32
    %c0_i32_0 = arith.constant 0 : i32
    %c0_i32_1 = arith.constant 0 : i32
    return %c0_i32, %c0_i32_0 : i32, i32
  }
  func.func @transform_11(%arg0: i32) -> (i32, i32) {
    %c0_i32 = arith.constant 0 : i32
    %c0_i32_0 = arith.constant 0 : i32
    %c0_i32_1 = arith.constant 0 : i32
    return %c0_i32, %c0_i32_0 : i32, i32
  }
  func.func @transform_12(%arg0: i32) -> (i32, i32, i32) {
    %c0_i32 = arith.constant 0 : i32
    %c0_i32_0 = arith.constant 0 : i32
    %c0_i32_1 = arith.constant 0 : i32
    return %arg0, %c0_i32, %c0_i32_0 : i32, i32, i32
  }
}

</mosaic_0001>

<llo_original>
// kernel: encoder_forward.1
$region0: #{encoder_forward.1}
  #allocation0 [shape = 'u32[]', space=smem, size = 0x4, offset = 0x4, fixed_abs, tag = 'smem constant byte address 0x4 - core index']
  #allocation1 [shape = 'u32[72,128]{1,0:T(1,128)}', space=vmem, size = 0x9000, scoped, tag = 'internal scratch']
  %s0 = inlined_call_operand.vmem [shape: f32[2,8,32], index: 0, kind: input, shape index: {}]
  %s1 = inlined_call_operand.vmem [shape: f32[8,32], index: 1, kind: input, shape index: {}]
  %s2 = inlined_call_operand.vmem [shape: f32[32,96], index: 2, kind: input, shape index: {}]
  %s3 = inlined_call_operand.vmem [shape: f32[32,32], index: 3, kind: input, shape index: {}]
  %s4 = inlined_call_operand.vmem [shape: f32[32,256], index: 4, kind: input, shape index: {}]
  %s5 = inlined_call_operand.vmem [shape: f32[256,32], index: 5, kind: input, shape index: {}]
  %s6 = inlined_call_operand.vmem [shape: f32[8,256], index: 6, kind: input, shape index: {}]
  %s7 = inlined_call_operand.vmem [shape: f32[32,96], index: 7, kind: input, shape index: {}]
  %s8 = inlined_call_operand.vmem [shape: f32[32,32], index: 8, kind: input, shape index: {}]
  %s9 = inlined_call_operand.vmem [shape: f32[32,256], index: 9, kind: input, shape index: {}]
  %s10 = inlined_call_operand.vmem [shape: f32[256,32], index: 10, kind: input, shape index: {}]
  %s11 = inlined_call_operand.vmem [shape: f32[8,256], index: 11, kind: input, shape index: {}]
  %s12 = inlined_call_operand.hbm [shape: f32[2,8,32], index: 12, kind: output, shape index: {}]
  %s13 = sld [smem:[#allocation0]]
  $region81: #{encoder_forward.1} parent=0
    _
  %s15 = ssub.s32 1, %s13
  %s16 = scalar_select 0, %s15, %s13
  $region1: #{encoder_forward.1} parent=0
    #allocation2 [shape = 'u8[8192]{0}', space=vmem, size = 0x2000, scoped, tag = 'output window, operand 0']
    #allocation3 [shape = 's32[2]{0}', space=sflag, size = 0x8, scoped, tag = 'scoped memory for encoder_forward.1']
    %17 = vsyncpa [#allocation3], 0
    %s18 = scalar_lea.sflag [#allocation3], 1
    %19 = vsyncpa %s18, 0
    loop: start=0, step=1, limit=4
    $region2: #{encoder_forward.1} parent=1 // loop_pre_header
      _
    $region3: #{encoder_forward.1} parent=1 // loop_header
      %s21 = sphi 0, %s25
      %p22 = scmp.ge.s32.totalorder %s21, 4
      %s31 = sphi 0, %s33
      %s34 = sphi 0, %s31
      %s35 = sphi 0, %s34
      %s51 = sphi 0, %s35
      %s55 = sphi 0, %s55
      %s57 = sphi 0, %s55
      %s58 = sphi 0, %s57
      %s72 = sphi 0, %s58
      %s76 = sphi 0, %s76
      %s78 = sphi 0, %s76
      %s79 = sphi 0, %s78
      %s93 = sphi 0, %s79
      %s97 = sphi 0, %s97
      %s99 = sphi 0, %s97
      %s100 = sphi 0, %s99
      %s114 = sphi 0, %s100
      %s118 = sphi 0, %s118
      %s120 = sphi 0, %s118
      %s121 = sphi 0, %s120
      %s135 = sphi 0, %s121
      %s139 = sphi 0, %s139
      %s141 = sphi 0, %s139
      %s142 = sphi 0, %s141
      %s156 = sphi 0, %s142
      %s160 = sphi 0, %s160
      %s162 = sphi 0, %s160
      %s163 = sphi 0, %s162
      %s177 = sphi 0, %s163
      %s181 = sphi 0, %s181
      %s183 = sphi 0, %s181
      %s184 = sphi 0, %s183
      %s198 = sphi 0, %s184
      %s202 = sphi 0, %s202
      %s204 = sphi 0, %s202
      %s205 = sphi 0, %s204
      %s219 = sphi 0, %s205
      %s223 = sphi 0, %s223
      %s225 = sphi 0, %s223
      %s226 = sphi 0, %s225
      %s240 = sphi 0, %s226
      %s244 = sphi 0, %s244
      %s246 = sphi 0, %s244
      %s247 = sphi 0, %s246
      %s261 = sphi 0, %s247
      %s265 = sphi 0, %s265
      %s267 = sphi 0, %s265
      %s268 = sphi 0, %s267
      %s282 = sphi 0, %s268
      %s288 = sphi 0, %s290
      %s291 = sphi 0, %s288
      %s292 = sphi 0, %s291
      %s308 = sphi 0, %s292
    $region4: #{encoder_forward.1} parent=1 // loop_header_branch
      %24 = sbr.rel (%p22) target = $region8
    $region5: #{encoder_forward.1} parent=1 // loop_body
      %s26 = ssub.s32 %s21, 1
      %s27 = ssub.s32 %s21, 2
      %s28 = sadd.s32 %s21, 1
      %s29 = ssub.s32 %s21, %s28
      %p30 = scmp.eq.s32.totalorder %s29, 0
      %s32 = sadd.s32 %s31, 1
      %s33 = scalar_select %p30, %s31, %s32
      %p36 = pneg %p30
      %p37 = scmp.eq.s32.totalorder %s21, 1
      %p38 = por %p36, %p37
      %p39 = scmp.ne.s32.totalorder %s31, %s34
      %p40 = scmp.eq.s32.totalorder %s21, 0
      %p41 = por %p39, %p40
      %p42 = scmp.ne.s32.totalorder %s31, %s34
      %p43 = scmp.eq.s32.totalorder %s26, 1
      %p44 = por %p42, %p43
      %p45 = scmp.ne.s32.totalorder %s34, %s35
      %p46 = scmp.eq.s32.totalorder %s26, 0
      %p47 = por %p45, %p46
      %p48 = scmp.ne.s32.totalorder %s34, %s35
      %p49 = scmp.eq.s32.totalorder %s27, 1
      %p50 = por %p48, %p49
      %p52 = scmp.ne.s32.totalorder %s35, %s51
      %p53 = scmp.eq.s32.totalorder %s27, 0
      %p54 = por %p52, %p53
      %s56 = sadd.s32 %s55, 1
      %p59 = scmp.eq.s32.totalorder %s21, 1
      %p60 = scmp.ne.s32.totalorder %s55, %s57
      %p61 = scmp.eq.s32.totalorder %s21, 0
      %p62 = por %p60, %p61
      %p63 = scmp.ne.s32.totalorder %s55, %s57
      %p64 = scmp.eq.s32.totalorder %s26, 1
      %p65 = por %p63, %p64
      %p66 = scmp.ne.s32.totalorder %s57, %s58
      %p67 = scmp.eq.s32.totalorder %s26, 0
      %p68 = por %p66, %p67
      %p69 = scmp.ne.s32.totalorder %s57, %s58
      %p70 = scmp.eq.s32.totalorder %s27, 1
      %p71 = por %p69, %p70
      %p73 = scmp.ne.s32.totalorder %s58, %s72
      %p74 = scmp.eq.s32.totalorder %s27, 0
      %p75 = por %p73, %p74
      %s77 = sadd.s32 %s76, 1
      %p80 = scmp.eq.s32.totalorder %s21, 1
      %p81 = scmp.ne.s32.totalorder %s76, %s78
      %p82 = scmp.eq.s32.totalorder %s21, 0
      %p83 = por %p81, %p82
      %p84 = scmp.ne.s32.totalorder %s76, %s78
      %p85 = scmp.eq.s32.totalorder %s26, 1
      %p86 = por %p84, %p85
      %p87 = scmp.ne.s32.totalorder %s78, %s79
      %p88 = scmp.eq.s32.totalorder %s26, 0
      %p89 = por %p87, %p88
      %p90 = scmp.ne.s32.totalorder %s78, %s79
      %p91 = scmp.eq.s32.totalorder %s27, 1
      %p92 = por %p90, %p91
      %p94 = scmp.ne.s32.totalorder %s79, %s93
      %p95 = scmp.eq.s32.totalorder %s27, 0
      %p96 = por %p94, %p95
      %s98 = sadd.s32 %s97, 1
      %p101 = scmp.eq.s32.totalorder %s21, 1
      %p102 = scmp.ne.s32.totalorder %s97, %s99
      %p103 = scmp.eq.s32.totalorder %s21, 0
      %p104 = por %p102, %p103
      %p105 = scmp.ne.s32.totalorder %s97, %s99
      %p106 = scmp.eq.s32.totalorder %s26, 1
      %p107 = por %p105, %p106
      %p108 = scmp.ne.s32.totalorder %s99, %s100
      %p109 = scmp.eq.s32.totalorder %s26, 0
      %p110 = por %p108, %p109
      %p111 = scmp.ne.s32.totalorder %s99, %s100
      %p112 = scmp.eq.s32.totalorder %s27, 1
      %p113 = por %p111, %p112
      %p115 = scmp.ne.s32.totalorder %s100, %s114
      %p116 = scmp.eq.s32.totalorder %s27, 0
      %p117 = por %p115, %p116
      %s119 = sadd.s32 %s118, 1
      %p122 = scmp.eq.s32.totalorder %s21, 1
      %p123 = scmp.ne.s32.totalorder %s118, %s120
      %p124 = scmp.eq.s32.totalorder %s21, 0
      %p125 = por %p123, %p124
      %p126 = scmp.ne.s32.totalorder %s118, %s120
      %p127 = scmp.eq.s32.totalorder %s26, 1
      %p128 = por %p126, %p127
      %p129 = scmp.ne.s32.totalorder %s120, %s121
      %p130 = scmp.eq.s32.totalorder %s26, 0
      %p131 = por %p129, %p130
      %p132 = scmp.ne.s32.totalorder %s120, %s121
      %p133 = scmp.eq.s32.totalorder %s27, 1
      %p134 = por %p132, %p133
      %p136 = scmp.ne.s32.totalorder %s121, %s135
      %p137 = scmp.eq.s32.totalorder %s27, 0
      %p138 = por %p136, %p137
      %s140 = sadd.s32 %s139, 1
      %p143 = scmp.eq.s32.totalorder %s21, 1
      %p144 = scmp.ne.s32.totalorder %s139, %s141
      %p145 = scmp.eq.s32.totalorder %s21, 0
      %p146 = por %p144, %p145
      %p147 = scmp.ne.s32.totalorder %s139, %s141
      %p148 = scmp.eq.s32.totalorder %s26, 1
      %p149 = por %p147, %p148
      %p150 = scmp.ne.s32.totalorder %s141, %s142
      %p151 = scmp.eq.s32.totalorder %s26, 0
      %p152 = por %p150, %p151
      %p153 = scmp.ne.s32.totalorder %s141, %s142
      %p154 = scmp.eq.s32.totalorder %s27, 1
      %p155 = por %p153, %p154
      %p157 = scmp.ne.s32.totalorder %s142, %s156
      %p158 = scmp.eq.s32.totalorder %s27, 0
      %p159 = por %p157, %p158
      %s161 = sadd.s32 %s160, 1
      %p164 = scmp.eq.s32.totalorder %s21, 1
      %p165 = scmp.ne.s32.totalorder %s160, %s162
      %p166 = scmp.eq.s32.totalorder %s21, 0
      %p167 = por %p165, %p166
      %p168 = scmp.ne.s32.totalorder %s160, %s162
      %p169 = scmp.eq.s32.totalorder %s26, 1
      %p170 = por %p168, %p169
      %p171 = scmp.ne.s32.totalorder %s162, %s163
      %p172 = scmp.eq.s32.totalorder %s26, 0
      %p173 = por %p171, %p172
      %p174 = scmp.ne.s32.totalorder %s162, %s163
      %p175 = scmp.eq.s32.totalorder %s27, 1
      %p176 = por %p174, %p175
      %p178 = scmp.ne.s32.totalorder %s163, %s177
      %p179 = scmp.eq.s32.totalorder %s27, 0
      %p180 = por %p178, %p179
      %s182 = sadd.s32 %s181, 1
      %p185 = scmp.eq.s32.totalorder %s21, 1
      %p186 = scmp.ne.s32.totalorder %s181, %s183
      %p187 = scmp.eq.s32.totalorder %s21, 0
      %p188 = por %p186, %p187
      %p189 = scmp.ne.s32.totalorder %s181, %s183
      %p190 = scmp.eq.s32.totalorder %s26, 1
      %p191 = por %p189, %p190
      %p192 = scmp.ne.s32.totalorder %s183, %s184
      %p193 = scmp.eq.s32.totalorder %s26, 0
      %p194 = por %p192, %p193
      %p195 = scmp.ne.s32.totalorder %s183, %s184
      %p196 = scmp.eq.s32.totalorder %s27, 1
      %p197 = por %p195, %p196
      %p199 = scmp.ne.s32.totalorder %s184, %s198
      %p200 = scmp.eq.s32.totalorder %s27, 0
      %p201 = por %p199, %p200
      %s203 = sadd.s32 %s202, 1
      %p206 = scmp.eq.s32.totalorder %s21, 1
      %p207 = scmp.ne.s32.totalorder %s202, %s204
      %p208 = scmp.eq.s32.totalorder %s21, 0
      %p209 = por %p207, %p208
      %p210 = scmp.ne.s32.totalorder %s202, %s204
      %p211 = scmp.eq.s32.totalorder %s26, 1
      %p212 = por %p210, %p211
      %p213 = scmp.ne.s32.totalorder %s204, %s205
      %p214 = scmp.eq.s32.totalorder %s26, 0
      %p215 = por %p213, %p214
      %p216 = scmp.ne.s32.totalorder %s204, %s205
      %p217 = scmp.eq.s32.totalorder %s27, 1
      %p218 = por %p216, %p217
      %p220 = scmp.ne.s32.totalorder %s205, %s219
      %p221 = scmp.eq.s32.totalorder %s27, 0
      %p222 = por %p220, %p221
      %s224 = sadd.s32 %s223, 1
      %p227 = scmp.eq.s32.totalorder %s21, 1
      %p228 = scmp.ne.s32.totalorder %s223, %s225
      %p229 = scmp.eq.s32.totalorder %s21, 0
      %p230 = por %p228, %p229
      %p231 = scmp.ne.s32.totalorder %s223, %s225
      %p232 = scmp.eq.s32.totalorder %s26, 1
      %p233 = por %p231, %p232
      %p234 = scmp.ne.s32.totalorder %s225, %s226
      %p235 = scmp.eq.s32.totalorder %s26, 0
      %p236 = por %p234, %p235
      %p237 = scmp.ne.s32.totalorder %s225, %s226
      %p238 = scmp.eq.s32.totalorder %s27, 1
      %p239 = por %p237, %p238
      %p241 = scmp.ne.s32.totalorder %s226, %s240
      %p242 = scmp.eq.s32.totalorder %s27, 0
      %p243 = por %p241, %p242
      %s245 = sadd.s32 %s244, 1
      %p248 = scmp.eq.s32.totalorder %s21, 1
      %p249 = scmp.ne.s32.totalorder %s244, %s246
      %p250 = scmp.eq.s32.totalorder %s21, 0
      %p251 = por %p249, %p250
      %p252 = scmp.ne.s32.totalorder %s244, %s246
      %p253 = scmp.eq.s32.totalorder %s26, 1
      %p254 = por %p252, %p253
      %p255 = scmp.ne.s32.totalorder %s246, %s247
      %p256 = scmp.eq.s32.totalorder %s26, 0
      %p257 = por %p255, %p256
      %p258 = scmp.ne.s32.totalorder %s246, %s247
      %p259 = scmp.eq.s32.totalorder %s27, 1
      %p260 = por %p258, %p259
      %p262 = scmp.ne.s32.totalorder %s247, %s261
      %p263 = scmp.eq.s32.totalorder %s27, 0
      %p264 = por %p262, %p263
      %s266 = sadd.s32 %s265, 1
      %p269 = scmp.eq.s32.totalorder %s21, 1
      %p270 = scmp.ne.s32.totalorder %s265, %s267
      %p271 = scmp.eq.s32.totalorder %s21, 0
      %p272 = por %p270, %p271
      %p273 = scmp.ne.s32.totalorder %s265, %s267
      %p274 = scmp.eq.s32.totalorder %s26, 1
      %p275 = por %p273, %p274
      %p276 = scmp.ne.s32.totalorder %s267, %s268
      %p277 = scmp.eq.s32.totalorder %s26, 0
      %p278 = por %p276, %p277
      %p279 = scmp.ne.s32.totalorder %s267, %s268
      %p280 = scmp.eq.s32.totalorder %s27, 1
      %p281 = por %p279, %p280
      %p283 = scmp.ne.s32.totalorder %s268, %s282
      %p284 = scmp.eq.s32.totalorder %s27, 0
      %p285 = por %p283, %p284
      %s286 = ssub.s32 %s21, %s28
      %p287 = scmp.eq.s32.totalorder %s286, 0
      %s289 = sadd.s32 %s288, 1
      %s290 = scalar_select %p287, %s288, %s289
      %p293 = pneg %p287
      %p294 = scmp.eq.s32.totalorder %s21, 1
      %p295 = por %p293, %p294
      %p296 = scmp.ne.s32.totalorder %s288, %s291
      %p297 = scmp.eq.s32.totalorder %s21, 0
      %p298 = por %p296, %p297
      %p299 = scmp.ne.s32.totalorder %s288, %s291
      %p300 = scmp.eq.s32.totalorder %s26, 1
      %p301 = por %p299, %p300
      %p302 = scmp.ne.s32.totalorder %s291, %s292
      %p303 = scmp.eq.s32.totalorder %s26, 0
      %p304 = por %p302, %p303
      %p305 = scmp.ne.s32.totalorder %s291, %s292
      %p306 = scmp.eq.s32.totalorder %s27, 1
      %p307 = por %p305, %p306
      %p309 = scmp.ne.s32.totalorder %s292, %s308
      %p310 = scmp.eq.s32.totalorder %s27, 0
      %p311 = por %p309, %p310
      %p312 = scmp.le.s32.totalorder 1, %s21
      %p313 = scmp.lt.s32.totalorder %s21, 3
      %p314 = pnand %p312, %p313
      %p315 = pneg %p314
      // Predicated region
      $region9: #{encoder_forward.1} parent=5 // pred_check
        _
      $region10: #{encoder_forward.1} parent=5 // pred_check_branch
        %317 = sbr.rel (%p314) target = $region12
      $region11: #{encoder_forward.1} parent=5 // pred_region
        %s318 = ssub.s32 %s21, 1
        // Predicated region
        $region13: #{encoder_forward.1} parent=11 // pred_check
          %p319 = pneg %p68
        $region14: #{encoder_forward.1} parent=11 // pred_check_branch
          %321 = sbr.rel (%p319) target = $region16
        $region15: #{encoder_forward.1} parent=11 // pred_region
          _
        $region16: #{encoder_forward.1} parent=11 // pred_fallthru
          _
        // Predicated region
        $region17: #{encoder_forward.1} parent=11 // pred_check
          %p322 = pneg %p89
        $region18: #{encoder_forward.1} parent=11 // pred_check_branch
          %324 = sbr.rel (%p322) target = $region20
        $region19: #{encoder_forward.1} parent=11 // pred_region
          _
        $region20: #{encoder_forward.1} parent=11 // pred_fallthru
          _
        // Predicated region
        $region21: #{encoder_forward.1} parent=11 // pred_check
          %p325 = pneg %p110
        $region22: #{encoder_forward.1} parent=11 // pred_check_branch
          %327 = sbr.rel (%p325) target = $region24
        $region23: #{encoder_forward.1} parent=11 // pred_region
          _
        $region24: #{encoder_forward.1} parent=11 // pred_fallthru
          _
        // Predicated region
        $region25: #{encoder_forward.1} parent=11 // pred_check
          %p328 = pneg %p131
        $region26: #{encoder_forward.1} parent=11 // pred_check_branch
          %330 = sbr.rel (%p328) target = $region28
        $region27: #{encoder_forward.1} parent=11 // pred_region
          _
        $region28: #{encoder_forward.1} parent=11 // pred_fallthru
          _
        // Predicated region
        $region29: #{encoder_forward.1} parent=11 // pred_check
          %p331 = pneg %p152
        $region30: #{encoder_forward.1} parent=11 // pred_check_branch
          %333 = sbr.rel (%p331) target = $region32
        $region31: #{encoder_forward.1} parent=11 // pred_region
          _
        $region32: #{encoder_forward.1} parent=11 // pred_fallthru
          _
        // Predicated region
        $region33: #{encoder_forward.1} parent=11 // pred_check
          %p334 = pneg %p173
        $region34: #{encoder_forward.1} parent=11 // pred_check_branch
          %336 = sbr.rel (%p334) target = $region36
        $region35: #{encoder_forward.1} parent=11 // pred_region
          _
        $region36: #{encoder_forward.1} parent=11 // pred_fallthru
          _
        // Predicated region
        $region37: #{encoder_forward.1} parent=11 // pred_check
          %p337 = pneg %p194
        $region38: #{encoder_forward.1} parent=11 // pred_check_branch
          %339 = sbr.rel (%p337) target = $region40
        $region39: #{encoder_forward.1} parent=11 // pred_region
          _
        $region40: #{encoder_forward.1} parent=11 // pred_fallthru
          _
        // Predicated region
        $region41: #{encoder_forward.1} parent=11 // pred_check
          %p340 = pneg %p215
        $region42: #{encoder_forward.1} parent=11 // pred_check_branch
          %342 = sbr.rel (%p340) target = $region44
        $region43: #{encoder_forward.1} parent=11 // pred_region
          _
        $region44: #{encoder_forward.1} parent=11 // pred_fallthru
          _
        // Predicated region
        $region45: #{encoder_forward.1} parent=11 // pred_check
          %p343 = pneg %p236
        $region46: #{encoder_forward.1} parent=11 // pred_check_branch
          %345 = sbr.rel (%p343) target = $region48
        $region47: #{encoder_forward.1} parent=11 // pred_region
          _
        $region48: #{encoder_forward.1} parent=11 // pred_fallthru
          _
        // Predicated region
        $region49: #{encoder_forward.1} parent=11 // pred_check
          %p346 = pneg %p257
        $region50: #{encoder_forward.1} parent=11 // pred_check_branch
          %348 = sbr.rel (%p346) target = $region52
        $region51: #{encoder_forward.1} parent=11 // pred_region
          _
        $region52: #{encoder_forward.1} parent=11 // pred_fallthru
          _
        // Predicated region
        $region53: #{encoder_forward.1} parent=11 // pred_check
          %p349 = pneg %p278
        $region54: #{encoder_forward.1} parent=11 // pred_check_branch
          %351 = sbr.rel (%p349) target = $region56
        $region55: #{encoder_forward.1} parent=11 // pred_region
          _
        $region56: #{encoder_forward.1} parent=11 // pred_fallthru
          _
      $region12: #{encoder_forward.1} parent=5 // pred_fallthru
        _
      %p352 = scmp.lt.s32.totalorder %s21, 2
      // Predicated region
      $region57: #{encoder_forward.1} parent=5 // pred_check
        %p353 = pneg %p352
      $region58: #{encoder_forward.1} parent=5 // pred_check_branch
        %355 = sbr.rel (%p353) target = $region60
      $region59: #{encoder_forward.1} parent=5 // pred_region
        // Predicated region
        $region61: #{encoder_forward.1} parent=59 // pred_check
          %p356 = pneg %p41
        $region62: #{encoder_forward.1} parent=59 // pred_check_branch
          %358 = sbr.rel (%p356) target = $region64
        $region63: #{encoder_forward.1} parent=59 // pred_region
          %p359 = scmp.lt.s32.totalorder %s21, 1
          %s360 = scalar_select %p359, %s21, 1
          %s361 = smul.addr %s360, 8
          %s362 = scalar_lea.vmem %s0, %s361
        $region64: #{encoder_forward.1} parent=59 // pred_fallthru
          _
      $region60: #{encoder_forward.1} parent=5 // pred_fallthru
        _
      %p363 = scmp.le.s32.totalorder 1, %s21
      %p364 = scmp.lt.s32.totalorder %s21, 3
      %p365 = pnand %p363, %p364
      %p366 = pneg %p365
      // Predicated region
      $region65: #{encoder_forward.1} parent=5 // pred_check
        _
      $region66: #{encoder_forward.1} parent=5 // pred_check_branch
        %368 = sbr.rel (%p365) target = $region68
      $region67: #{encoder_forward.1} parent=5 // pred_region
        %s369 = ssub.s32 %s21, 1
        %p370 = scmp.lt.s32.totalorder %s26, 1
        %s371 = scalar_select %p370, %s26, 1
        %s372 = smul.addr %s371, 8
        %s373 = scalar_lea.vmem %s0, %s372
        %p374 = pneg %p47
        %p375 = pneg %p44
        %p376 = pneg %p68
        %p377 = pneg %p65
        %p378 = pneg %p89
        %p379 = pneg %p86
        %p380 = pneg %p110
        %p381 = pneg %p107
        %p382 = pneg %p131
        %p383 = pneg %p128
        %p384 = pneg %p152
        %p385 = pneg %p149
        %p386 = pneg %p173
        %p387 = pneg %p170
        %p388 = pneg %p194
        %p389 = pneg %p191
        %p390 = pneg %p215
        %p391 = pneg %p212
        %p392 = pneg %p236
        %p393 = pneg %p233
        %p394 = pneg %p257
        %p395 = pneg %p254
        %p396 = pneg %p278
        %p397 = pneg %p275
        %p398 = pneg %p304
        %p399 = pneg %p301
        %s400 = sand.u32 %s291, 1
        %s401 = scalar_lea.sflag [#allocation3], %s400
        %s402 = sand.u32 %s291, 1
        %s403 = smul.addr %s402, 8
        %s404 = scalar_lea.vmem [#allocation2], %s403
        %p405 = scmp.lt.s32.totalorder %s26, 1
        %s406 = scalar_select %p405, %s26, 1
        %s407 = smul.addr %s406, 8
        %s408 = scalar_lea.vmem %s0, %s407
        %v409 = vld [vmem:[%s408] sm:$0xff]
        %v410 = vld [vmem:[%s1] sm:$0xff]
        %v411 = vadd.f32 %v409, %v410
        %v412 = vld [vmem:[%s6] sm:$0xff]
        %v413 = vld [vmem:[%s6 + $0x8] sm:$0xff]
        %v414 = vld [vmem:[%s2] sm:$0xff]
        %v415 = vld [vmem:[%s2 + $0x8] sm:$0xff]
        %v416 = vld [vmem:[%s2 + $0x10] sm:$0xff]
        %v417 = vld [vmem:[%s2 + $0x18] sm:$0xff]
        %v418 = vperm.slane %v412, 0
        %vm419 = vcmask 261120
        %v421 = vsel %vm419, %v411, 0
        %423 = vmatpush.msra.mxu0 0.0
        %424 = vmatpush.msra.mxu0 0.0
        %425 = vmatpush.msra.mxu0 0.0
        %426 = vmatpush.msra.mxu0 0.0
        %427 = vmatpush.msra.mxu0 0.0
        %428 = vmatpush.msra.mxu0 0.0
        %429 = vmatpush.msra.mxu0 0.0
        %430 = vmatpush.msra.mxu0 0.0
        %431 = vmatpush.msra.mxu0 0.0
        %432 = vmatpush.msra.mxu0 0.0
        %433 = vmatpush.msra.mxu0 0.0
        %434 = vmatpush.msra.mxu0 0.0
        %435 = vmatpush.msra.mxu0 %v417
        %436 = vmatpush.msra.mxu0 %v416
        %437 = vmatpush.msra.mxu0 %v415
        %438 = vmatpush.msra.mxu0 %v414
        %439 = vmatmul.f32.gmra.mxu0 %v421
        %v440 = vpop.f32.mrf.mxu0
        %v441 = vadd.f32 %v418, %v440
        %442 = vdwg.mxu0
        %444 = vrot.lane.b32.xlu0 %v441, 96
        %v445 = vpop.permute.xlu0 %444
        %vm446 = vcmask 64512
        %v447 = vsel %vm446, %v441, 0
        %v449 = vsel %vm446, %v445, 0
        %451 = vmatpush.xpose.msra.mxu0 0.0
        %452 = vmatpush.xpose.msra.mxu0 0.0
        %453 = vmatpush.xpose.msra.mxu0 0.0
        %454 = vmatpush.xpose.msra.mxu0 0.0
        %455 = vmatpush.xpose.msra.mxu0 0.0
        %456 = vmatpush.xpose.msra.mxu0 0.0
        %457 = vmatpush.xpose.msra.mxu0 0.0
        %458 = vmatpush.xpose.msra.mxu0 0.0
        %459 = vmatpush.xpose.msra.mxu0 0.0
        %460 = vmatpush.xpose.msra.mxu0 0.0
        %461 = vmatpush.xpose.msra.mxu0 0.0
        %462 = vmatpush.xpose.msra.mxu0 0.0
        %463 = vmatpush.xpose.msra.mxu0 0.0
        %464 = vmatpush.xpose.msra.mxu0 0.0
        %465 = vmatpush.xpose.msra.mxu0 0.0
        %466 = vmatpush.xpose.msra.mxu0 %v449
        %467 = vmatmul.f32.gmra.mxu0 %v447
        %v468 = vpop.f32.mrf.mxu0
        %v469 = vadd.f32 0.0, %v468
        %470 = vdwg.mxu0
        %v471 = vmul.f32 %v469, 0.35355338
        %v472 = vsel %vm446, %v471, -inf
        %473 = vmax.xlane.f32.xlu0 %v472
        %v474 = vpop.xlane.xlu0 %473
        %v475 = vsub.f32 %v471, %v474
        %v476 = vmul.f32 %v475, 1.442695
        %v477 = vpow.pop %v476
        %v478 = vsel %vm446, %v477, 0.0
        %479 = vadd.xlane.f32.xlu0 %v478
        %v480 = vpop.xlane.xlu0 %479
        %v481 = vrcp.pop %v480
        %v482 = vmul.f32 %v480, %v481
        %v483 = vsub.f32 1.0, %v482
        %v484 = vmul.f32 %v481, %v483
        %v485 = vadd.f32 %v481, %v484
        %vm486 = vweird.f32 %v480
        %vm487 = vweird.f32 %v481
        %vm488 = vmor %vm486, %vm487
        %v489 = vsel %vm488, %v481, %v485
        %v490 = vand.u32 2147483647, %v480
        %vm491 = vcmp.eq.f32.partialorder %v490, 8.507059e+37
        %v492 = vand.u32 %v480, 2147483648
        %v493 = vor.u32 1.1754944e-38, %v492
        %v494 = vsel %vm491, %v493, %v489
        %v495 = vmul.f32 %v477, %v494
        %vm496 = vcmp.gt.f32.partialorder %v471, 0.0
        %v497 = vsel %vm496, %v495, 0.0
        %498 = vrot.lane.b32.xlu0 %v441, 64
        %v499 = vpop.permute.xlu0 %498
        %v502 = vsel %vm446, %v497, 0
        %504 = vmatpush.msra.mxu0 0.0
        %505 = vmatpush.msra.mxu0 0.0
        %506 = vmatpush.msra.mxu0 0.0
        %507 = vmatpush.msra.mxu0 0.0
        %508 = vmatpush.msra.mxu0 0.0
        %509 = vmatpush.msra.mxu0 0.0
        %510 = vmatpush.msra.mxu0 0.0
        %511 = vmatpush.msra.mxu0 0.0
        %512 = vmatpush.msra.mxu0 0.0
        %513 = vmatpush.msra.mxu0 0.0
        %514 = vmatpush.msra.mxu0 0.0
        %515 = vmatpush.msra.mxu0 0.0
        %516 = vmatpush.msra.mxu0 0.0
        %517 = vmatpush.msra.mxu0 0.0
        %518 = vmatpush.msra.mxu0 0.0
        %519 = vmatpush.msra.mxu0 %v499
        %520 = vmatmul.f32.gmra.mxu0 %v502
        %v521 = vpop.f32.mrf.mxu0
        %v522 = vadd.f32 0.0, %v521
        %523 = vdwg.mxu0
        %v524 = vld [vmem:[%s3] sm:$0xff]
        %525 = vrot.lane.b32.xlu0 %v441, 120
        %v526 = vpop.permute.xlu0 %525
        %527 = vrot.lane.b32.xlu0 %v441, 88
        %v528 = vpop.permute.xlu0 %527
        %v529 = vsel %vm446, %v526, 0
        %v531 = vsel %vm446, %v528, 0
        %533 = vmatpush.xpose.msra.mxu0 0.0
        %534 = vmatpush.xpose.msra.mxu0 0.0
        %535 = vmatpush.xpose.msra.mxu0 0.0
        %536 = vmatpush.xpose.msra.mxu0 0.0
        %537 = vmatpush.xpose.msra.mxu0 0.0
        %538 = vmatpush.xpose.msra.mxu0 0.0
        %539 = vmatpush.xpose.msra.mxu0 0.0
        %540 = vmatpush.xpose.msra.mxu0 0.0
        %541 = vmatpush.xpose.msra.mxu0 0.0
        %542 = vmatpush.xpose.msra.mxu0 0.0
        %543 = vmatpush.xpose.msra.mxu0 0.0
        %544 = vmatpush.xpose.msra.mxu0 0.0
        %545 = vmatpush.xpose.msra.mxu0 0.0
        %546 = vmatpush.xpose.msra.mxu0 0.0
        %547 = vmatpush.xpose.msra.mxu0 0.0
        %548 = vmatpush.xpose.msra.mxu0 %v531
        %549 = vmatmul.f32.gmra.mxu0 %v529
        %v550 = vpop.f32.mrf.mxu0
        %v551 = vadd.f32 0.0, %v550
        %552 = vdwg.mxu0
        %v553 = vmul.f32 %v551, 0.35355338
        %v554 = vsel %vm446, %v553, -inf
        %555 = vmax.xlane.f32.xlu0 %v554
        %v556 = vpop.xlane.xlu0 %555
        %v557 = vsub.f32 %v553, %v556
        %v558 = vmul.f32 %v557, 1.442695
        %v559 = vpow.pop %v558
        %v560 = vsel %vm446, %v559, 0.0
        %561 = vadd.xlane.f32.xlu0 %v560
        %v562 = vpop.xlane.xlu0 %561
        %v563 = vrcp.pop %v562
        %v564 = vmul.f32 %v562, %v563
        %v565 = vsub.f32 1.0, %v564
        %v566 = vmul.f32 %v563, %v565
        %v567 = vadd.f32 %v563, %v566
        %vm568 = vweird.f32 %v562
        %vm569 = vweird.f32 %v563
        %vm570 = vmor %vm568, %vm569
        %v571 = vsel %vm570, %v563, %v567
        %v572 = vand.u32 2147483647, %v562
        %vm573 = vcmp.eq.f32.partialorder %v572, 8.507059e+37
        %v574 = vand.u32 %v562, 2147483648
        %v575 = vor.u32 1.1754944e-38, %v574
        %v576 = vsel %vm573, %v575, %v571
        %v577 = vmul.f32 %v559, %v576
        %vm578 = vcmp.gt.f32.partialorder %v553, 0.0
        %v579 = vsel %vm578, %v577, 0.0
        %580 = vrot.lane.b32.xlu0 %v441, 56
        %v581 = vpop.permute.xlu0 %580
        %v584 = vsel %vm446, %v579, 0
        %586 = vmatpush.msra.mxu0 0.0
        %587 = vmatpush.msra.mxu0 0.0
        %588 = vmatpush.msra.mxu0 0.0
        %589 = vmatpush.msra.mxu0 0.0
        %590 = vmatpush.msra.mxu0 0.0
        %591 = vmatpush.msra.mxu0 0.0
        %592 = vmatpush.msra.mxu0 0.0
        %593 = vmatpush.msra.mxu0 0.0
        %594 = vmatpush.msra.mxu0 0.0
        %595 = vmatpush.msra.mxu0 0.0
        %596 = vmatpush.msra.mxu0 0.0
        %597 = vmatpush.msra.mxu0 0.0
        %598 = vmatpush.msra.mxu0 0.0
        %599 = vmatpush.msra.mxu0 0.0
        %600 = vmatpush.msra.mxu0 0.0
        %601 = vmatpush.msra.mxu0 %v581
        %602 = vmatmul.f32.gmra.mxu0 %v584
        %v603 = vpop.f32.mrf.mxu0
        %v604 = vadd.f32 0.0, %v603
        %605 = vdwg.mxu0
        %v606 = vld [vmem:[%s3 + $0x8] sm:$0xff]
        %v608 = vsel %vm446, %v604, 0
        %610 = vmatpush.msra.mxu0 0.0
        %611 = vmatpush.msra.mxu0 0.0
        %612 = vmatpush.msra.mxu0 0.0
        %613 = vmatpush.msra.mxu0 0.0
        %614 = vmatpush.msra.mxu0 0.0
        %615 = vmatpush.msra.mxu0 0.0
        %616 = vmatpush.msra.mxu0 0.0
        %617 = vmatpush.msra.mxu0 0.0
        %618 = vmatpush.msra.mxu0 0.0
        %619 = vmatpush.msra.mxu0 0.0
        %620 = vmatpush.msra.mxu0 0.0
        %621 = vmatpush.msra.mxu0 0.0
        %622 = vmatpush.msra.mxu0 0.0
        %623 = vmatpush.msra.mxu0 0.0
        %624 = vmatpush.msra.mxu0 0.0
        %625 = vmatpush.msra.mxu0 %v606
        %626 = vmatmul.f32.gmra.mxu0 %v608
        %v627 = vpop.f32.mrf.mxu0
        %v628 = vadd.f32 0.0, %v627
        %629 = vdwg.mxu0
        %v631 = vsel %vm446, %v522, 0
        %633 = vmatpush.msra.mxu0 0.0
        %634 = vmatpush.msra.mxu0 0.0
        %635 = vmatpush.msra.mxu0 0.0
        %636 = vmatpush.msra.mxu0 0.0
        %637 = vmatpush.msra.mxu0 0.0
        %638 = vmatpush.msra.mxu0 0.0
        %639 = vmatpush.msra.mxu0 0.0
        %640 = vmatpush.msra.mxu0 0.0
        %641 = vmatpush.msra.mxu0 0.0
        %642 = vmatpush.msra.mxu0 0.0
        %643 = vmatpush.msra.mxu0 0.0
        %644 = vmatpush.msra.mxu0 0.0
        %645 = vmatpush.msra.mxu0 0.0
        %646 = vmatpush.msra.mxu0 0.0
        %647 = vmatpush.msra.mxu0 0.0
        %648 = vmatpush.msra.mxu0 %v524
        %649 = vmatmul.f32.gmra.mxu0 %v631
        %v650 = vpop.f32.mrf.mxu0
        %v651 = vadd.f32 %v628, %v650
        %652 = vdwg.mxu0
        %653 = vrot.lane.b32.xlu0 %v441, 112
        %v654 = vpop.permute.xlu0 %653
        %655 = vrot.lane.b32.xlu0 %v441, 80
        %v656 = vpop.permute.xlu0 %655
        %v657 = vsel %vm446, %v654, 0
        %v659 = vsel %vm446, %v656, 0
        %661 = vmatpush.xpose.msra.mxu0 0.0
        %662 = vmatpush.xpose.msra.mxu0 0.0
        %663 = vmatpush.xpose.msra.mxu0 0.0
        %664 = vmatpush.xpose.msra.mxu0 0.0
        %665 = vmatpush.xpose.msra.mxu0 0.0
        %666 = vmatpush.xpose.msra.mxu0 0.0
        %667 = vmatpush.xpose.msra.mxu0 0.0
        %668 = vmatpush.xpose.msra.mxu0 0.0
        %669 = vmatpush.xpose.msra.mxu0 0.0
        %670 = vmatpush.xpose.msra.mxu0 0.0
        %671 = vmatpush.xpose.msra.mxu0 0.0
        %672 = vmatpush.xpose.msra.mxu0 0.0
        %673 = vmatpush.xpose.msra.mxu0 0.0
        %674 = vmatpush.xpose.msra.mxu0 0.0
        %675 = vmatpush.xpose.msra.mxu0 0.0
        %676 = vmatpush.xpose.msra.mxu0 %v659
        %677 = vmatmul.f32.gmra.mxu0 %v657
        %v678 = vpop.f32.mrf.mxu0
        %v679 = vadd.f32 0.0, %v678
        %680 = vdwg.mxu0
        %v681 = vmul.f32 %v679, 0.35355338
        %v682 = vsel %vm446, %v681, -inf
        %683 = vmax.xlane.f32.xlu0 %v682
        %v684 = vpop.xlane.xlu0 %683
        %v685 = vsub.f32 %v681, %v684
        %v686 = vmul.f32 %v685, 1.442695
        %v687 = vpow.pop %v686
        %v688 = vsel %vm446, %v687, 0.0
        %689 = vadd.xlane.f32.xlu0 %v688
        %v690 = vpop.xlane.xlu0 %689
        %v691 = vrcp.pop %v690
        %v692 = vmul.f32 %v690, %v691
        %v693 = vsub.f32 1.0, %v692
        %v694 = vmul.f32 %v691, %v693
        %v695 = vadd.f32 %v691, %v694
        %vm696 = vweird.f32 %v690
        %vm697 = vweird.f32 %v691
        %vm698 = vmor %vm696, %vm697
        %v699 = vsel %vm698, %v691, %v695
        %v700 = vand.u32 2147483647, %v690
        %vm701 = vcmp.eq.f32.partialorder %v700, 8.507059e+37
        %v702 = vand.u32 %v690, 2147483648
        %v703 = vor.u32 1.1754944e-38, %v702
        %v704 = vsel %vm701, %v703, %v699
        %v705 = vmul.f32 %v687, %v704
        %vm706 = vcmp.gt.f32.partialorder %v681, 0.0
        %v707 = vsel %vm706, %v705, 0.0
        %708 = vrot.lane.b32.xlu0 %v441, 48
        %v709 = vpop.permute.xlu0 %708
        %v712 = vsel %vm446, %v707, 0
        %714 = vmatpush.msra.mxu0 0.0
        %715 = vmatpush.msra.mxu0 0.0
        %716 = vmatpush.msra.mxu0 0.0
        %717 = vmatpush.msra.mxu0 0.0
        %718 = vmatpush.msra.mxu0 0.0
        %719 = vmatpush.msra.mxu0 0.0
        %720 = vmatpush.msra.mxu0 0.0
        %721 = vmatpush.msra.mxu0 0.0
        %722 = vmatpush.msra.mxu0 0.0
        %723 = vmatpush.msra.mxu0 0.0
        %724 = vmatpush.msra.mxu0 0.0
        %725 = vmatpush.msra.mxu0 0.0
        %726 = vmatpush.msra.mxu0 0.0
        %727 = vmatpush.msra.mxu0 0.0
        %728 = vmatpush.msra.mxu0 0.0
        %729 = vmatpush.msra.mxu0 %v709
        %730 = vmatmul.f32.gmra.mxu0 %v712
        %v731 = vpop.f32.mrf.mxu0
        %v732 = vadd.f32 0.0, %v731
        %733 = vdwg.mxu0
        %v734 = vld [vmem:[%s3 + $0x10] sm:$0xff]
        %v736 = vsel %vm446, %v732, 0
        %738 = vmatpush.msra.mxu0 0.0
        %739 = vmatpush.msra.mxu0 0.0
        %740 = vmatpush.msra.mxu0 0.0
        %741 = vmatpush.msra.mxu0 0.0
        %742 = vmatpush.msra.mxu0 0.0
        %743 = vmatpush.msra.mxu0 0.0
        %744 = vmatpush.msra.mxu0 0.0
        %745 = vmatpush.msra.mxu0 0.0
        %746 = vmatpush.msra.mxu0 0.0
        %747 = vmatpush.msra.mxu0 0.0
        %748 = vmatpush.msra.mxu0 0.0
        %749 = vmatpush.msra.mxu0 0.0
        %750 = vmatpush.msra.mxu0 0.0
        %751 = vmatpush.msra.mxu0 0.0
        %752 = vmatpush.msra.mxu0 0.0
        %753 = vmatpush.msra.mxu0 %v734
        %754 = vmatmul.f32.gmra.mxu0 %v736
        %v755 = vpop.f32.mrf.mxu0
        %v756 = vadd.f32 0.0, %v755
        %757 = vdwg.mxu0
        %v758 = vadd.f32 %v651, %v756
        %759 = vrot.lane.b32.xlu0 %v441, 104
        %v760 = vpop.permute.xlu0 %759
        %761 = vrot.lane.b32.xlu0 %v441, 72
        %v762 = vpop.permute.xlu0 %761
        %v763 = vsel %vm446, %v760, 0
        %v765 = vsel %vm446, %v762, 0
        %767 = vmatpush.xpose.msra.mxu0 0.0
        %768 = vmatpush.xpose.msra.mxu0 0.0
        %769 = vmatpush.xpose.msra.mxu0 0.0
        %770 = vmatpush.xpose.msra.mxu0 0.0
        %771 = vmatpush.xpose.msra.mxu0 0.0
        %772 = vmatpush.xpose.msra.mxu0 0.0
        %773 = vmatpush.xpose.msra.mxu0 0.0
        %774 = vmatpush.xpose.msra.mxu0 0.0
        %775 = vmatpush.xpose.msra.mxu0 0.0
        %776 = vmatpush.xpose.msra.mxu0 0.0
        %777 = vmatpush.xpose.msra.mxu0 0.0
        %778 = vmatpush.xpose.msra.mxu0 0.0
        %779 = vmatpush.xpose.msra.mxu0 0.0
        %780 = vmatpush.xpose.msra.mxu0 0.0
        %781 = vmatpush.xpose.msra.mxu0 0.0
        %782 = vmatpush.xpose.msra.mxu0 %v765
        %783 = vmatmul.f32.gmra.mxu0 %v763
        %v784 = vpop.f32.mrf.mxu0
        %v785 = vadd.f32 0.0, %v784
        %786 = vdwg.mxu0
        %v787 = vmul.f32 %v785, 0.35355338
        %v788 = vsel %vm446, %v787, -inf
        %789 = vmax.xlane.f32.xlu0 %v788
        %v790 = vpop.xlane.xlu0 %789
        %v791 = vsub.f32 %v787, %v790
        %v792 = vmul.f32 %v791, 1.442695
        %v793 = vpow.pop %v792
        %v794 = vsel %vm446, %v793, 0.0
        %795 = vadd.xlane.f32.xlu0 %v794
        %v796 = vpop.xlane.xlu0 %795
        %v797 = vrcp.pop %v796
        %v798 = vmul.f32 %v796, %v797
        %v799 = vsub.f32 1.0, %v798
        %v800 = vmul.f32 %v797, %v799
        %v801 = vadd.f32 %v797, %v800
        %vm802 = vweird.f32 %v796
        %vm803 = vweird.f32 %v797
        %vm804 = vmor %vm802, %vm803
        %v805 = vsel %vm804, %v797, %v801
        %v806 = vand.u32 2147483647, %v796
        %vm807 = vcmp.eq.f32.partialorder %v806, 8.507059e+37
        %v808 = vand.u32 %v796, 2147483648
        %v809 = vor.u32 1.1754944e-38, %v808
        %v810 = vsel %vm807, %v809, %v805
        %v811 = vmul.f32 %v793, %v810
        %vm812 = vcmp.gt.f32.partialorder %v787, 0.0
        %v813 = vsel %vm812, %v811, 0.0
        %814 = vrot.lane.b32.xlu0 %v441, 40
        %v815 = vpop.permute.xlu0 %814
        %v818 = vsel %vm446, %v813, 0
        %820 = vmatpush.msra.mxu0 0.0
        %821 = vmatpush.msra.mxu0 0.0
        %822 = vmatpush.msra.mxu0 0.0
        %823 = vmatpush.msra.mxu0 0.0
        %824 = vmatpush.msra.mxu0 0.0
        %825 = vmatpush.msra.mxu0 0.0
        %826 = vmatpush.msra.mxu0 0.0
        %827 = vmatpush.msra.mxu0 0.0
        %828 = vmatpush.msra.mxu0 0.0
        %829 = vmatpush.msra.mxu0 0.0
        %830 = vmatpush.msra.mxu0 0.0
        %831 = vmatpush.msra.mxu0 0.0
        %832 = vmatpush.msra.mxu0 0.0
        %833 = vmatpush.msra.mxu0 0.0
        %834 = vmatpush.msra.mxu0 0.0
        %835 = vmatpush.msra.mxu0 %v815
        %836 = vmatmul.f32.gmra.mxu0 %v818
        %v837 = vpop.f32.mrf.mxu0
        %v838 = vadd.f32 0.0, %v837
        %839 = vdwg.mxu0
        %v840 = vld [vmem:[%s3 + $0x18] sm:$0xff]
        %v842 = vsel %vm446, %v838, 0
        %844 = vmatpush.msra.mxu0 0.0
        %845 = vmatpush.msra.mxu0 0.0
        %846 = vmatpush.msra.mxu0 0.0
        %847 = vmatpush.msra.mxu0 0.0
        %848 = vmatpush.msra.mxu0 0.0
        %849 = vmatpush.msra.mxu0 0.0
        %850 = vmatpush.msra.mxu0 0.0
        %851 = vmatpush.msra.mxu0 0.0
        %852 = vmatpush.msra.mxu0 0.0
        %853 = vmatpush.msra.mxu0 0.0
        %854 = vmatpush.msra.mxu0 0.0
        %855 = vmatpush.msra.mxu0 0.0
        %856 = vmatpush.msra.mxu0 0.0
        %857 = vmatpush.msra.mxu0 0.0
        %858 = vmatpush.msra.mxu0 0.0
        %859 = vmatpush.msra.mxu0 %v840
        %860 = vmatmul.f32.gmra.mxu0 %v842
        %v861 = vpop.f32.mrf.mxu0
        %v862 = vadd.f32 0.0, %v861
        %863 = vdwg.mxu0
        %v864 = vadd.f32 %v758, %v862
        %v865 = vperm.slane %v412, 2
        %v866 = vadd.f32 %v864, %v865
        %v867 = vsel %vm419, %v866, 0.0
        %868 = vadd.xlane.f32.xlu0 %v867
        %v869 = vpop.xlane.xlu0 %868
        %v870 = vrcp.pop 32.0
        %v871 = vmul.f32 32.0, %v870
        %v872 = vsub.f32 1.0, %v871
        %v873 = vmul.f32 %v870, %v872
        %v874 = vadd.f32 %v870, %v873
        %vm875 = vweird.f32 %v870
        %v876 = vsel %vm875, %v870, %v874
        %v877 = vmul.f32 %v869, %v876
        %v878 = vsub.f32 %v866, %v877
        %v879 = vmul.f32 %v878, %v878
        %v880 = vsel %vm419, %v879, 0.0
        %881 = vadd.xlane.f32.xlu0 %v880
        %v882 = vpop.xlane.xlu0 %881
        %v883 = vmul.f32 %v882, %v876
        %v884 = vadd.f32 %v883, 1e-05
        %v885 = vrsqrt.pop %v884
        %v886 = vmul.f32 %v885, %v884
        %v887 = vmul.f32 %v886, %v885
        %v888 = vmul.f32 0.5, %v887
        %v889 = vsub.f32 1.5, %v888
        %v890 = vmul.f32 %v885, %v889
        %vm891 = vweird.f32 %v884
        %vm892 = vweird.f32 %v885
        %vm893 = vmor %vm891, %vm892
        %v894 = vsel %vm893, %v885, %v890
        %v895 = vmul.f32 %v878, %v894
        %v896 = vperm.slane %v412, 3
        %v897 = vmul.f32 %v895, %v896
        %v898 = vperm.slane %v412, 4
        %v899 = vadd.f32 %v897, %v898
        %v900 = vadd.f32 %v411, %v899
        %v901 = vld [vmem:[%s4] sm:$0xff]
        %v902 = vld [vmem:[%s4 + $0x8] sm:$0xff]
        %v903 = vld [vmem:[%s4 + $0x10] sm:$0xff]
        %v904 = vld [vmem:[%s4 + $0x18] sm:$0xff]
        %v905 = vld [vmem:[%s4 + $0x20] sm:$0xff]
        %v906 = vld [vmem:[%s4 + $0x28] sm:$0xff]
        %v907 = vld [vmem:[%s4 + $0x30] sm:$0xff]
        %v908 = vld [vmem:[%s4 + $0x38] sm:$0xff]
        %v909 = vperm.slane %v412, 1
        %v910 = vperm.slane %v413, 1
        %v912 = vsel %vm419, %v900, 0
        %914 = vmatpush.msra.mxu0 0.0
        %915 = vmatpush.msra.mxu0 0.0
        %916 = vmatpush.msra.mxu0 0.0
        %917 = vmatpush.msra.mxu0 0.0
        %918 = vmatpush.msra.mxu0 0.0
        %919 = vmatpush.msra.mxu0 0.0
        %920 = vmatpush.msra.mxu0 0.0
        %921 = vmatpush.msra.mxu0 0.0
        %922 = vmatpush.msra.mxu0 0.0
        %923 = vmatpush.msra.mxu0 0.0
        %924 = vmatpush.msra.mxu0 0.0
        %925 = vmatpush.msra.mxu0 0.0
        %926 = vmatpush.msra.mxu0 %v907
        %927 = vmatpush.msra.mxu0 %v905
        %928 = vmatpush.msra.mxu0 %v903
        %929 = vmatpush.msra.mxu0 %v901
        %930 = vmatmul.f32.gmra.mxu0 %v912
        %v931 = vpop.f32.mrf.mxu0
        %v932 = vadd.f32 %v909, %v931
        %933 = vdwg.mxu0
        %934 = vmatpush.msra.mxu0 0.0
        %935 = vmatpush.msra.mxu0 0.0
        %936 = vmatpush.msra.mxu0 0.0
        %937 = vmatpush.msra.mxu0 0.0
        %938 = vmatpush.msra.mxu0 0.0
        %939 = vmatpush.msra.mxu0 0.0
        %940 = vmatpush.msra.mxu0 0.0
        %941 = vmatpush.msra.mxu0 0.0
        %942 = vmatpush.msra.mxu0 0.0
        %943 = vmatpush.msra.mxu0 0.0
        %944 = vmatpush.msra.mxu0 0.0
        %945 = vmatpush.msra.mxu0 0.0
        %946 = vmatpush.msra.mxu0 %v908
        %947 = vmatpush.msra.mxu0 %v906
        %948 = vmatpush.msra.mxu0 %v904
        %949 = vmatpush.msra.mxu0 %v902
        %950 = vmatmul.f32.gmra.mxu0 %v912
        %v951 = vpop.f32.mrf.mxu0
        %v952 = vadd.f32 %v910, %v951
        %953 = vdwg.mxu0
        %v954 = vmul.f32 %v932, 0.5
        %v955 = vmul.f32 %v952, 0.5
        %v956 = vmul.f32 %v932, 0.70710677
        %v957 = vmul.f32 %v952, 0.70710677
        %vm958 = vcmp.ge.f32.partialorder %v956, 0.0
        %vm959 = vcmp.ge.f32.partialorder %v957, 0.0
        %v960 = vsel %vm958, 1.0, -1.0
        %v961 = vsel %vm959, 1.0, -1.0
        %v962 = vand.u32 2147483647, %v956
        %v963 = vand.u32 2147483647, %v957
        %v964 = vmul.f32 %v962, 0.3275911
        %v965 = vmul.f32 %v963, 0.3275911
        %v966 = vadd.f32 %v964, 1.0
        %v967 = vadd.f32 %v965, 1.0
        %v968 = vrcp.pop %v966
        %v969 = vmul.f32 %v966, %v968
        %v970 = vsub.f32 1.0, %v969
        %v971 = vmul.f32 %v968, %v970
        %v972 = vadd.f32 %v968, %v971
        %vm973 = vweird.f32 %v966
        %vm974 = vweird.f32 %v968
        %vm975 = vmor %vm973, %vm974
        %v976 = vsel %vm975, %v968, %v972
        %v977 = vand.u32 2147483647, %v966
        %vm978 = vcmp.eq.f32.partialorder %v977, 8.507059e+37
        %v979 = vand.u32 %v966, 2147483648
        %v980 = vor.u32 1.1754944e-38, %v979
        %v981 = vsel %vm978, %v980, %v976
        %v982 = vmul.f32 1.0, %v981
        %v983 = vrcp.pop %v967
        %v984 = vmul.f32 %v967, %v983
        %v985 = vsub.f32 1.0, %v984
        %v986 = vmul.f32 %v983, %v985
        %v987 = vadd.f32 %v983, %v986
        %vm988 = vweird.f32 %v967
        %vm989 = vweird.f32 %v983
        %vm990 = vmor %vm988, %vm989
        %v991 = vsel %vm990, %v983, %v987
        %v992 = vand.u32 2147483647, %v967
        %vm993 = vcmp.eq.f32.partialorder %v992, 8.507059e+37
        %v994 = vand.u32 %v967, 2147483648
        %v995 = vor.u32 1.1754944e-38, %v994
        %v996 = vsel %vm993, %v995, %v991
        %v997 = vmul.f32 1.0, %v996
        %v998 = vmul.f32 %v982, 1.0614054
        %v999 = vmul.f32 %v997, 1.0614054
        %v1000 = vadd.f32 %v998, -1.4531521
        %v1001 = vadd.f32 %v999, -1.4531521
        %v1002 = vmul.f32 %v1000, %v982
        %v1003 = vmul.f32 %v1001, %v997
        %v1004 = vadd.f32 %v1002, 1.4214138
        %v1005 = vadd.f32 %v1003, 1.4214138
        %v1006 = vmul.f32 %v1004, %v982
        %v1007 = vmul.f32 %v1005, %v997
        %v1008 = vadd.f32 %v1006, -0.28449672
        %v1009 = vadd.f32 %v1007, -0.28449672
        %v1010 = vmul.f32 %v1008, %v982
        %v1011 = vmul.f32 %v1009, %v997
        %v1012 = vadd.f32 %v1010, 0.2548296
        %v1013 = vadd.f32 %v1011, 0.2548296
        %v1014 = vmul.f32 %v1012, %v982
        %v1015 = vmul.f32 %v1013, %v997
        %v1016 = vsub.f32 0.0, %v962
        %v1017 = vsub.f32 0.0, %v963
        %v1018 = vmul.f32 %v1016, %v962
        %v1019 = vmul.f32 %v1017, %v963
        %v1020 = vmul.f32 %v1018, 1.442695
        %v1021 = vpow.pop %v1020
        %v1022 = vmul.f32 %v1019, 1.442695
        %v1023 = vpow.pop %v1022
        %v1024 = vmul.f32 %v1014, %v1021
        %v1025 = vmul.f32 %v1015, %v1023
        %v1026 = vsub.f32 1.0, %v1024
        %v1027 = vsub.f32 1.0, %v1025
        %v1028 = vmul.f32 %v960, %v1026
        %v1029 = vmul.f32 %v961, %v1027
        %v1030 = vadd.f32 %v1028, 1.0
        %v1031 = vadd.f32 %v1029, 1.0
        %v1032 = vmul.f32 %v954, %v1030
        %v1033 = vmul.f32 %v955, %v1031
        %v1034 = vld [vmem:[%s5] sm:$0xff]
        %v1035 = vld [vmem:[%s5 + $0x8] sm:$0xff]
        %v1036 = vld [vmem:[%s5 + $0x10] sm:$0xff]
        %v1037 = vld [vmem:[%s5 + $0x18] sm:$0xff]
        %v1038 = vld [vmem:[%s5 + $0x20] sm:$0xff]
        %v1039 = vld [vmem:[%s5 + $0x28] sm:$0xff]
        %v1040 = vld [vmem:[%s5 + $0x30] sm:$0xff]
        %v1041 = vld [vmem:[%s5 + $0x38] sm:$0xff]
        %v1042 = vld [vmem:[%s5 + $0x40] sm:$0xff]
        %v1043 = vld [vmem:[%s5 + $0x48] sm:$0xff]
        %v1044 = vld [vmem:[%s5 + $0x50] sm:$0xff]
        %v1045 = vld [vmem:[%s5 + $0x58] sm:$0xff]
        %v1046 = vld [vmem:[%s5 + $0x60] sm:$0xff]
        %v1047 = vld [vmem:[%s5 + $0x68] sm:$0xff]
        %v1048 = vld [vmem:[%s5 + $0x70] sm:$0xff]
        %v1049 = vld [vmem:[%s5 + $0x78] sm:$0xff]
        %v1050 = vld [vmem:[%s5 + $0x80] sm:$0xff]
        %v1051 = vld [vmem:[%s5 + $0x88] sm:$0xff]
        %v1052 = vld [vmem:[%s5 + $0x90] sm:$0xff]
        %v1053 = vld [vmem:[%s5 + $0x98] sm:$0xff]
        %v1054 = vld [vmem:[%s5 + $0xa0] sm:$0xff]
        %v1055 = vld [vmem:[%s5 + $0xa8] sm:$0xff]
        %v1056 = vld [vmem:[%s5 + $0xb0] sm:$0xff]
        %v1057 = vld [vmem:[%s5 + $0xb8] sm:$0xff]
        %v1058 = vld [vmem:[%s5 + $0xc0] sm:$0xff]
        %v1059 = vld [vmem:[%s5 + $0xc8] sm:$0xff]
        %v1060 = vld [vmem:[%s5 + $0xd0] sm:$0xff]
        %v1061 = vld [vmem:[%s5 + $0xd8] sm:$0xff]
        %v1062 = vld [vmem:[%s5 + $0xe0] sm:$0xff]
        %v1063 = vld [vmem:[%s5 + $0xe8] sm:$0xff]
        %v1064 = vld [vmem:[%s5 + $0xf0] sm:$0xff]
        %v1065 = vld [vmem:[%s5 + $0xf8] sm:$0xff]
        %v1066 = vperm.slane %v412, 5
        %1067 = vmatpush.msra.mxu0 %v1049
        %1068 = vmatpush.msra.mxu0 %v1048
        %1069 = vmatpush.msra.mxu0 %v1047
        %1070 = vmatpush.msra.mxu0 %v1046
        %1071 = vmatpush.msra.mxu0 %v1045
        %1072 = vmatpush.msra.mxu0 %v1044
        %1073 = vmatpush.msra.mxu0 %v1043
        %1074 = vmatpush.msra.mxu0 %v1042
        %1075 = vmatpush.msra.mxu0 %v1041
        %1076 = vmatpush.msra.mxu0 %v1040
        %1077 = vmatpush.msra.mxu0 %v1039
        %1078 = vmatpush.msra.mxu0 %v1038
        %1079 = vmatpush.msra.mxu0 %v1037
        %1080 = vmatpush.msra.mxu0 %v1036
        %1081 = vmatpush.msra.mxu0 %v1035
        %1082 = vmatpush.msra.mxu0 %v1034
        %1083 = vmatmul.f32.gmra.mxu0 %v1032
        %v1084 = vpop.f32.mrf.mxu0
        %v1085 = vadd.f32 %v1066, %v1084
        %1086 = vdwg.mxu0
        %1087 = vmatpush.msra.mxu0 %v1065
        %1088 = vmatpush.msra.mxu0 %v1064
        %1089 = vmatpush.msra.mxu0 %v1063
        %1090 = vmatpush.msra.mxu0 %v1062
        %1091 = vmatpush.msra.mxu0 %v1061
        %1092 = vmatpush.msra.mxu0 %v1060
        %1093 = vmatpush.msra.mxu0 %v1059
        %1094 = vmatpush.msra.mxu0 %v1058
        %1095 = vmatpush.msra.mxu0 %v1057
        %1096 = vmatpush.msra.mxu0 %v1056
        %1097 = vmatpush.msra.mxu0 %v1055
        %1098 = vmatpush.msra.mxu0 %v1054
        %1099 = vmatpush.msra.mxu0 %v1053
        %1100 = vmatpush.msra.mxu0 %v1052
        %1101 = vmatpush.msra.mxu0 %v1051
        %1102 = vmatpush.msra.mxu0 %v1050
        %1103 = vmatmul.f32.gmra.mxu0 %v1033
        %v1104 = vpop.f32.mrf.mxu0
        %v1105 = vadd.f32 %v1085, %v1104
        %1106 = vdwg.mxu0
        %v1107 = vsel %vm419, %v1105, 0.0
        %1108 = vadd.xlane.f32.xlu0 %v1107
        %v1109 = vpop.xlane.xlu0 %1108
        %v1110 = vmul.f32 %v1109, %v876
        %v1111 = vsub.f32 %v1105, %v1110
        %v1112 = vmul.f32 %v1111, %v1111
        %v1113 = vsel %vm419, %v1112, 0.0
        %1114 = vadd.xlane.f32.xlu0 %v1113
        %v1115 = vpop.xlane.xlu0 %1114
        %v1116 = vmul.f32 %v1115, %v876
        %v1117 = vadd.f32 %v1116, 1e-05
        %v1118 = vrsqrt.pop %v1117
        %v1119 = vmul.f32 %v1118, %v1117
        %v1120 = vmul.f32 %v1119, %v1118
        %v1121 = vmul.f32 0.5, %v1120
        %v1122 = vsub.f32 1.5, %v1121
        %v1123 = vmul.f32 %v1118, %v1122
        %vm1124 = vweird.f32 %v1117
        %vm1125 = vweird.f32 %v1118
        %vm1126 = vmor %vm1124, %vm1125
        %v1127 = vsel %vm1126, %v1118, %v1123
        %v1128 = vmul.f32 %v1111, %v1127
        %v1129 = vmul.f32 %v1128, %v896
        %v1130 = vadd.f32 %v1129, %v898
        %v1131 = vadd.f32 %v900, %v1130
        %v1132 = vld [vmem:[%s11] sm:$0xff]
        %v1133 = vld [vmem:[%s11 + $0x8] sm:$0xff]
        %v1134 = vld [vmem:[%s7] sm:$0xff]
        %v1135 = vld [vmem:[%s7 + $0x8] sm:$0xff]
        %v1136 = vld [vmem:[%s7 + $0x10] sm:$0xff]
        %v1137 = vld [vmem:[%s7 + $0x18] sm:$0xff]
        %v1138 = vperm.slane %v1132, 0
        %v1140 = vsel %vm419, %v1131, 0
        %1142 = vmatpush.msra.mxu0 0.0
        %1143 = vmatpush.msra.mxu0 0.0
        %1144 = vmatpush.msra.mxu0 0.0
        %1145 = vmatpush.msra.mxu0 0.0
        %1146 = vmatpush.msra.mxu0 0.0
        %1147 = vmatpush.msra.mxu0 0.0
        %1148 = vmatpush.msra.mxu0 0.0
        %1149 = vmatpush.msra.mxu0 0.0
        %1150 = vmatpush.msra.mxu0 0.0
        %1151 = vmatpush.msra.mxu0 0.0
        %1152 = vmatpush.msra.mxu0 0.0
        %1153 = vmatpush.msra.mxu0 0.0
        %1154 = vmatpush.msra.mxu0 %v1137
        %1155 = vmatpush.msra.mxu0 %v1136
        %1156 = vmatpush.msra.mxu0 %v1135
        %1157 = vmatpush.msra.mxu0 %v1134
        %1158 = vmatmul.f32.gmra.mxu0 %v1140
        %v1159 = vpop.f32.mrf.mxu0
        %v1160 = vadd.f32 %v1138, %v1159
        %1161 = vdwg.mxu0
        %1163 = vrot.lane.b32.xlu0 %v1160, 96
        %v1164 = vpop.permute.xlu0 %1163
        %v1165 = vsel %vm446, %v1160, 0
        %v1167 = vsel %vm446, %v1164, 0
        %1169 = vmatpush.xpose.msra.mxu0 0.0
        %1170 = vmatpush.xpose.msra.mxu0 0.0
        %1171 = vmatpush.xpose.msra.mxu0 0.0
        %1172 = vmatpush.xpose.msra.mxu0 0.0
        %1173 = vmatpush.xpose.msra.mxu0 0.0
        %1174 = vmatpush.xpose.msra.mxu0 0.0
        %1175 = vmatpush.xpose.msra.mxu0 0.0
        %1176 = vmatpush.xpose.msra.mxu0 0.0
        %1177 = vmatpush.xpose.msra.mxu0 0.0
        %1178 = vmatpush.xpose.msra.mxu0 0.0
        %1179 = vmatpush.xpose.msra.mxu0 0.0
        %1180 = vmatpush.xpose.msra.mxu0 0.0
        %1181 = vmatpush.xpose.msra.mxu0 0.0
        %1182 = vmatpush.xpose.msra.mxu0 0.0
        %1183 = vmatpush.xpose.msra.mxu0 0.0
        %1184 = vmatpush.xpose.msra.mxu0 %v1167
        %1185 = vmatmul.f32.gmra.mxu0 %v1165
        %v1186 = vpop.f32.mrf.mxu0
        %v1187 = vadd.f32 0.0, %v1186
        %1188 = vdwg.mxu0
        %v1189 = vmul.f32 %v1187, 0.35355338
        %v1190 = vsel %vm446, %v1189, -inf
        %1191 = vmax.xlane.f32.xlu0 %v1190
        %v1192 = vpop.xlane.xlu0 %1191
        %v1193 = vsub.f32 %v1189, %v1192
        %v1194 = vmul.f32 %v1193, 1.442695
        %v1195 = vpow.pop %v1194
        %v1196 = vsel %vm446, %v1195, 0.0
        %1197 = vadd.xlane.f32.xlu0 %v1196
        %v1198 = vpop.xlane.xlu0 %1197
        %v1199 = vrcp.pop %v1198
        %v1200 = vmul.f32 %v1198, %v1199
        %v1201 = vsub.f32 1.0, %v1200
        %v1202 = vmul.f32 %v1199, %v1201
        %v1203 = vadd.f32 %v1199, %v1202
        %vm1204 = vweird.f32 %v1198
        %vm1205 = vweird.f32 %v1199
        %vm1206 = vmor %vm1204, %vm1205
        %v1207 = vsel %vm1206, %v1199, %v1203
        %v1208 = vand.u32 2147483647, %v1198
        %vm1209 = vcmp.eq.f32.partialorder %v1208, 8.507059e+37
        %v1210 = vand.u32 %v1198, 2147483648
        %v1211 = vor.u32 1.1754944e-38, %v1210
        %v1212 = vsel %vm1209, %v1211, %v1207
        %v1213 = vmul.f32 %v1195, %v1212
        %vm1214 = vcmp.gt.f32.partialorder %v1189, 0.0
        %v1215 = vsel %vm1214, %v1213, 0.0
        %1216 = vrot.lane.b32.xlu0 %v1160, 64
        %v1217 = vpop.permute.xlu0 %1216
        %v1220 = vsel %vm446, %v1215, 0
        %1222 = vmatpush.msra.mxu0 0.0
        %1223 = vmatpush.msra.mxu0 0.0
        %1224 = vmatpush.msra.mxu0 0.0
        %1225 = vmatpush.msra.mxu0 0.0
        %1226 = vmatpush.msra.mxu0 0.0
        %1227 = vmatpush.msra.mxu0 0.0
        %1228 = vmatpush.msra.mxu0 0.0
        %1229 = vmatpush.msra.mxu0 0.0
        %1230 = vmatpush.msra.mxu0 0.0
        %1231 = vmatpush.msra.mxu0 0.0
        %1232 = vmatpush.msra.mxu0 0.0
        %1233 = vmatpush.msra.mxu0 0.0
        %1234 = vmatpush.msra.mxu0 0.0
        %1235 = vmatpush.msra.mxu0 0.0
        %1236 = vmatpush.msra.mxu0 0.0
        %1237 = vmatpush.msra.mxu0 %v1217
        %1238 = vmatmul.f32.gmra.mxu0 %v1220
        %v1239 = vpop.f32.mrf.mxu0
        %v1240 = vadd.f32 0.0, %v1239
        %1241 = vdwg.mxu0
        %v1242 = vld [vmem:[%s8] sm:$0xff]
        %1243 = vrot.lane.b32.xlu0 %v1160, 120
        %v1244 = vpop.permute.xlu0 %1243
        %1245 = vrot.lane.b32.xlu0 %v1160, 88
        %v1246 = vpop.permute.xlu0 %1245
        %v1247 = vsel %vm446, %v1244, 0
        %v1249 = vsel %vm446, %v1246, 0
        %1251 = vmatpush.xpose.msra.mxu0 0.0
        %1252 = vmatpush.xpose.msra.mxu0 0.0
        %1253 = vmatpush.xpose.msra.mxu0 0.0
        %1254 = vmatpush.xpose.msra.mxu0 0.0
        %1255 = vmatpush.xpose.msra.mxu0 0.0
        %1256 = vmatpush.xpose.msra.mxu0 0.0
        %1257 = vmatpush.xpose.msra.mxu0 0.0
        %1258 = vmatpush.xpose.msra.mxu0 0.0
        %1259 = vmatpush.xpose.msra.mxu0 0.0
        %1260 = vmatpush.xpose.msra.mxu0 0.0
        %1261 = vmatpush.xpose.msra.mxu0 0.0
        %1262 = vmatpush.xpose.msra.mxu0 0.0
        %1263 = vmatpush.xpose.msra.mxu0 0.0
        %1264 = vmatpush.xpose.msra.mxu0 0.0
        %1265 = vmatpush.xpose.msra.mxu0 0.0
        %1266 = vmatpush.xpose.msra.mxu0 %v1249
        %1267 = vmatmul.f32.gmra.mxu0 %v1247
        %v1268 = vpop.f32.mrf.mxu0
        %v1269 = vadd.f32 0.0, %v1268
        %1270 = vdwg.mxu0
        %v1271 = vmul.f32 %v1269, 0.35355338
        %v1272 = vsel %vm446, %v1271, -inf
        %1273 = vmax.xlane.f32.xlu0 %v1272
        %v1274 = vpop.xlane.xlu0 %1273
        %v1275 = vsub.f32 %v1271, %v1274
        %v1276 = vmul.f32 %v1275, 1.442695
        %v1277 = vpow.pop %v1276
        %v1278 = vsel %vm446, %v1277, 0.0
        %1279 = vadd.xlane.f32.xlu0 %v1278
        %v1280 = vpop.xlane.xlu0 %1279
        %v1281 = vrcp.pop %v1280
        %v1282 = vmul.f32 %v1280, %v1281
        %v1283 = vsub.f32 1.0, %v1282
        %v1284 = vmul.f32 %v1281, %v1283
        %v1285 = vadd.f32 %v1281, %v1284
        %vm1286 = vweird.f32 %v1280
        %vm1287 = vweird.f32 %v1281
        %vm1288 = vmor %vm1286, %vm1287
        %v1289 = vsel %vm1288, %v1281, %v1285
        %v1290 = vand.u32 2147483647, %v1280
        %vm1291 = vcmp.eq.f32.partialorder %v1290, 8.507059e+37
        %v1292 = vand.u32 %v1280, 2147483648
        %v1293 = vor.u32 1.1754944e-38, %v1292
        %v1294 = vsel %vm1291, %v1293, %v1289
        %v1295 = vmul.f32 %v1277, %v1294
        %vm1296 = vcmp.gt.f32.partialorder %v1271, 0.0
        %v1297 = vsel %vm1296, %v1295, 0.0
        %1298 = vrot.lane.b32.xlu0 %v1160, 56
        %v1299 = vpop.permute.xlu0 %1298
        %v1302 = vsel %vm446, %v1297, 0
        %1304 = vmatpush.msra.mxu0 0.0
        %1305 = vmatpush.msra.mxu0 0.0
        %1306 = vmatpush.msra.mxu0 0.0
        %1307 = vmatpush.msra.mxu0 0.0
        %1308 = vmatpush.msra.mxu0 0.0
        %1309 = vmatpush.msra.mxu0 0.0
        %1310 = vmatpush.msra.mxu0 0.0
        %1311 = vmatpush.msra.mxu0 0.0
        %1312 = vmatpush.msra.mxu0 0.0
        %1313 = vmatpush.msra.mxu0 0.0
        %1314 = vmatpush.msra.mxu0 0.0
        %1315 = vmatpush.msra.mxu0 0.0
        %1316 = vmatpush.msra.mxu0 0.0
        %1317 = vmatpush.msra.mxu0 0.0
        %1318 = vmatpush.msra.mxu0 0.0
        %1319 = vmatpush.msra.mxu0 %v1299
        %1320 = vmatmul.f32.gmra.mxu0 %v1302
        %v1321 = vpop.f32.mrf.mxu0
        %v1322 = vadd.f32 0.0, %v1321
        %1323 = vdwg.mxu0
        %v1324 = vld [vmem:[%s8 + $0x8] sm:$0xff]
        %v1326 = vsel %vm446, %v1322, 0
        %1328 = vmatpush.msra.mxu0 0.0
        %1329 = vmatpush.msra.mxu0 0.0
        %1330 = vmatpush.msra.mxu0 0.0
        %1331 = vmatpush.msra.mxu0 0.0
        %1332 = vmatpush.msra.mxu0 0.0
        %1333 = vmatpush.msra.mxu0 0.0
        %1334 = vmatpush.msra.mxu0 0.0
        %1335 = vmatpush.msra.mxu0 0.0
        %1336 = vmatpush.msra.mxu0 0.0
        %1337 = vmatpush.msra.mxu0 0.0
        %1338 = vmatpush.msra.mxu0 0.0
        %1339 = vmatpush.msra.mxu0 0.0
        %1340 = vmatpush.msra.mxu0 0.0
        %1341 = vmatpush.msra.mxu0 0.0
        %1342 = vmatpush.msra.mxu0 0.0
        %1343 = vmatpush.msra.mxu0 %v1324
        %1344 = vmatmul.f32.gmra.mxu0 %v1326
        %v1345 = vpop.f32.mrf.mxu0
        %v1346 = vadd.f32 0.0, %v1345
        %1347 = vdwg.mxu0
        %v1349 = vsel %vm446, %v1240, 0
        %1351 = vmatpush.msra.mxu0 0.0
        %1352 = vmatpush.msra.mxu0 0.0
        %1353 = vmatpush.msra.mxu0 0.0
        %1354 = vmatpush.msra.mxu0 0.0
        %1355 = vmatpush.msra.mxu0 0.0
        %1356 = vmatpush.msra.mxu0 0.0
        %1357 = vmatpush.msra.mxu0 0.0
        %1358 = vmatpush.msra.mxu0 0.0
        %1359 = vmatpush.msra.mxu0 0.0
        %1360 = vmatpush.msra.mxu0 0.0
        %1361 = vmatpush.msra.mxu0 0.0
        %1362 = vmatpush.msra.mxu0 0.0
        %1363 = vmatpush.msra.mxu0 0.0
        %1364 = vmatpush.msra.mxu0 0.0
        %1365 = vmatpush.msra.mxu0 0.0
        %1366 = vmatpush.msra.mxu0 %v1242
        %1367 = vmatmul.f32.gmra.mxu0 %v1349
        %v1368 = vpop.f32.mrf.mxu0
        %v1369 = vadd.f32 %v1346, %v1368
        %1370 = vdwg.mxu0
        %1371 = vrot.lane.b32.xlu0 %v1160, 112
        %v1372 = vpop.permute.xlu0 %1371
        %1373 = vrot.lane.b32.xlu0 %v1160, 80
        %v1374 = vpop.permute.xlu0 %1373
        %v1375 = vsel %vm446, %v1372, 0
        %v1377 = vsel %vm446, %v1374, 0
        %1379 = vmatpush.xpose.msra.mxu0 0.0
        %1380 = vmatpush.xpose.msra.mxu0 0.0
        %1381 = vmatpush.xpose.msra.mxu0 0.0
        %1382 = vmatpush.xpose.msra.mxu0 0.0
        %1383 = vmatpush.xpose.msra.mxu0 0.0
        %1384 = vmatpush.xpose.msra.mxu0 0.0
        %1385 = vmatpush.xpose.msra.mxu0 0.0
        %1386 = vmatpush.xpose.msra.mxu0 0.0
        %1387 = vmatpush.xpose.msra.mxu0 0.0
        %1388 = vmatpush.xpose.msra.mxu0 0.0
        %1389 = vmatpush.xpose.msra.mxu0 0.0
        %1390 = vmatpush.xpose.msra.mxu0 0.0
        %1391 = vmatpush.xpose.msra.mxu0 0.0
        %1392 = vmatpush.xpose.msra.mxu0 0.0
        %1393 = vmatpush.xpose.msra.mxu0 0.0
        %1394 = vmatpush.xpose.msra.mxu0 %v1377
        %1395 = vmatmul.f32.gmra.mxu0 %v1375
        %v1396 = vpop.f32.mrf.mxu0
        %v1397 = vadd.f32 0.0, %v1396
        %1398 = vdwg.mxu0
        %v1399 = vmul.f32 %v1397, 0.35355338
        %v1400 = vsel %vm446, %v1399, -inf
        %1401 = vmax.xlane.f32.xlu0 %v1400
        %v1402 = vpop.xlane.xlu0 %1401
        %v1403 = vsub.f32 %v1399, %v1402
        %v1404 = vmul.f32 %v1403, 1.442695
        %v1405 = vpow.pop %v1404
        %v1406 = vsel %vm446, %v1405, 0.0
        %1407 = vadd.xlane.f32.xlu0 %v1406
        %v1408 = vpop.xlane.xlu0 %1407
        %v1409 = vrcp.pop %v1408
        %v1410 = vmul.f32 %v1408, %v1409
        %v1411 = vsub.f32 1.0, %v1410
        %v1412 = vmul.f32 %v1409, %v1411
        %v1413 = vadd.f32 %v1409, %v1412
        %vm1414 = vweird.f32 %v1408
        %vm1415 = vweird.f32 %v1409
        %vm1416 = vmor %vm1414, %vm1415
        %v1417 = vsel %vm1416, %v1409, %v1413
        %v1418 = vand.u32 2147483647, %v1408
        %vm1419 = vcmp.eq.f32.partialorder %v1418, 8.507059e+37
        %v1420 = vand.u32 %v1408, 2147483648
        %v1421 = vor.u32 1.1754944e-38, %v1420
        %v1422 = vsel %vm1419, %v1421, %v1417
        %v1423 = vmul.f32 %v1405, %v1422
        %vm1424 = vcmp.gt.f32.partialorder %v1399, 0.0
        %v1425 = vsel %vm1424, %v1423, 0.0
        %1426 = vrot.lane.b32.xlu0 %v1160, 48
        %v1427 = vpop.permute.xlu0 %1426
        %v1430 = vsel %vm446, %v1425, 0
        %1432 = vmatpush.msra.mxu0 0.0
        %1433 = vmatpush.msra.mxu0 0.0
        %1434 = vmatpush.msra.mxu0 0.0
        %1435 = vmatpush.msra.mxu0 0.0
        %1436 = vmatpush.msra.mxu0 0.0
        %1437 = vmatpush.msra.mxu0 0.0
        %1438 = vmatpush.msra.mxu0 0.0
        %1439 = vmatpush.msra.mxu0 0.0
        %1440 = vmatpush.msra.mxu0 0.0
        %1441 = vmatpush.msra.mxu0 0.0
        %1442 = vmatpush.msra.mxu0 0.0
        %1443 = vmatpush.msra.mxu0 0.0
        %1444 = vmatpush.msra.mxu0 0.0
        %1445 = vmatpush.msra.mxu0 0.0
        %1446 = vmatpush.msra.mxu0 0.0
        %1447 = vmatpush.msra.mxu0 %v1427
        %1448 = vmatmul.f32.gmra.mxu0 %v1430
        %v1449 = vpop.f32.mrf.mxu0
        %v1450 = vadd.f32 0.0, %v1449
        %1451 = vdwg.mxu0
        %v1452 = vld [vmem:[%s8 + $0x10] sm:$0xff]
        %v1454 = vsel %vm446, %v1450, 0
        %1456 = vmatpush.msra.mxu0 0.0
        %1457 = vmatpush.msra.mxu0 0.0
        %1458 = vmatpush.msra.mxu0 0.0
        %1459 = vmatpush.msra.mxu0 0.0
        %1460 = vmatpush.msra.mxu0 0.0
        %1461 = vmatpush.msra.mxu0 0.0
        %1462 = vmatpush.msra.mxu0 0.0
        %1463 = vmatpush.msra.mxu0 0.0
        %1464 = vmatpush.msra.mxu0 0.0
        %1465 = vmatpush.msra.mxu0 0.0
        %1466 = vmatpush.msra.mxu0 0.0
        %1467 = vmatpush.msra.mxu0 0.0
        %1468 = vmatpush.msra.mxu0 0.0
        %1469 = vmatpush.msra.mxu0 0.0
        %1470 = vmatpush.msra.mxu0 0.0
        %1471 = vmatpush.msra.mxu0 %v1452
        %1472 = vmatmul.f32.gmra.mxu0 %v1454
        %v1473 = vpop.f32.mrf.mxu0
        %v1474 = vadd.f32 0.0, %v1473
        %1475 = vdwg.mxu0
        %v1476 = vadd.f32 %v1369, %v1474
        %1477 = vrot.lane.b32.xlu0 %v1160, 104
        %v1478 = vpop.permute.xlu0 %1477
        %1479 = vrot.lane.b32.xlu0 %v1160, 72
        %v1480 = vpop.permute.xlu0 %1479
        %v1481 = vsel %vm446, %v1478, 0
        %v1483 = vsel %vm446, %v1480, 0
        %1485 = vmatpush.xpose.msra.mxu0 0.0
        %1486 = vmatpush.xpose.msra.mxu0 0.0
        %1487 = vmatpush.xpose.msra.mxu0 0.0
        %1488 = vmatpush.xpose.msra.mxu0 0.0
        %1489 = vmatpush.xpose.msra.mxu0 0.0
        %1490 = vmatpush.xpose.msra.mxu0 0.0
        %1491 = vmatpush.xpose.msra.mxu0 0.0
        %1492 = vmatpush.xpose.msra.mxu0 0.0
        %1493 = vmatpush.xpose.msra.mxu0 0.0
        %1494 = vmatpush.xpose.msra.mxu0 0.0
        %1495 = vmatpush.xpose.msra.mxu0 0.0
        %1496 = vmatpush.xpose.msra.mxu0 0.0
        %1497 = vmatpush.xpose.msra.mxu0 0.0
        %1498 = vmatpush.xpose.msra.mxu0 0.0
        %1499 = vmatpush.xpose.msra.mxu0 0.0
        %1500 = vmatpush.xpose.msra.mxu0 %v1483
        %1501 = vmatmul.f32.gmra.mxu0 %v1481
        %v1502 = vpop.f32.mrf.mxu0
        %v1503 = vadd.f32 0.0, %v1502
        %1504 = vdwg.mxu0
        %v1505 = vmul.f32 %v1503, 0.35355338
        %v1506 = vsel %vm446, %v1505, -inf
        %1507 = vmax.xlane.f32.xlu0 %v1506
        %v1508 = vpop.xlane.xlu0 %1507
        %v1509 = vsub.f32 %v1505, %v1508
        %v1510 = vmul.f32 %v1509, 1.442695
        %v1511 = vpow.pop %v1510
        %v1512 = vsel %vm446, %v1511, 0.0
        %1513 = vadd.xlane.f32.xlu0 %v1512
        %v1514 = vpop.xlane.xlu0 %1513
        %v1515 = vrcp.pop %v1514
        %v1516 = vmul.f32 %v1514, %v1515
        %v1517 = vsub.f32 1.0, %v1516
        %v1518 = vmul.f32 %v1515, %v1517
        %v1519 = vadd.f32 %v1515, %v1518
        %vm1520 = vweird.f32 %v1514
        %vm1521 = vweird.f32 %v1515
        %vm1522 = vmor %vm1520, %vm1521
        %v1523 = vsel %vm1522, %v1515, %v1519
        %v1524 = vand.u32 2147483647, %v1514
        %vm1525 = vcmp.eq.f32.partialorder %v1524, 8.507059e+37
        %v1526 = vand.u32 %v1514, 2147483648
        %v1527 = vor.u32 1.1754944e-38, %v1526
        %v1528 = vsel %vm1525, %v1527, %v1523
        %v1529 = vmul.f32 %v1511, %v1528
        %vm1530 = vcmp.gt.f32.partialorder %v1505, 0.0
        %v1531 = vsel %vm1530, %v1529, 0.0
        %1532 = vrot.lane.b32.xlu0 %v1160, 40
        %v1533 = vpop.permute.xlu0 %1532
        %v1536 = vsel %vm446, %v1531, 0
        %1538 = vmatpush.msra.mxu0 0.0
        %1539 = vmatpush.msra.mxu0 0.0
        %1540 = vmatpush.msra.mxu0 0.0
        %1541 = vmatpush.msra.mxu0 0.0
        %1542 = vmatpush.msra.mxu0 0.0
        %1543 = vmatpush.msra.mxu0 0.0
        %1544 = vmatpush.msra.mxu0 0.0
        %1545 = vmatpush.msra.mxu0 0.0
        %1546 = vmatpush.msra.mxu0 0.0
        %1547 = vmatpush.msra.mxu0 0.0
        %1548 = vmatpush.msra.mxu0 0.0
        %1549 = vmatpush.msra.mxu0 0.0
        %1550 = vmatpush.msra.mxu0 0.0
        %1551 = vmatpush.msra.mxu0 0.0
        %1552 = vmatpush.msra.mxu0 0.0
        %1553 = vmatpush.msra.mxu0 %v1533
        %1554 = vmatmul.f32.gmra.mxu0 %v1536
        %v1555 = vpop.f32.mrf.mxu0
        %v1556 = vadd.f32 0.0, %v1555
        %1557 = vdwg.mxu0
        %v1558 = vld [vmem:[%s8 + $0x18] sm:$0xff]
        %v1560 = vsel %vm446, %v1556, 0
        %1562 = vmatpush.msra.mxu0 0.0
        %1563 = vmatpush.msra.mxu0 0.0
        %1564 = vmatpush.msra.mxu0 0.0
        %1565 = vmatpush.msra.mxu0 0.0
        %1566 = vmatpush.msra.mxu0 0.0
        %1567 = vmatpush.msra.mxu0 0.0
        %1568 = vmatpush.msra.mxu0 0.0
        %1569 = vmatpush.msra.mxu0 0.0
        %1570 = vmatpush.msra.mxu0 0.0
        %1571 = vmatpush.msra.mxu0 0.0
        %1572 = vmatpush.msra.mxu0 0.0
        %1573 = vmatpush.msra.mxu0 0.0
        %1574 = vmatpush.msra.mxu0 0.0
        %1575 = vmatpush.msra.mxu0 0.0
        %1576 = vmatpush.msra.mxu0 0.0
        %1577 = vmatpush.msra.mxu0 %v1558
        %1578 = vmatmul.f32.gmra.mxu0 %v1560
        %v1579 = vpop.f32.mrf.mxu0
        %v1580 = vadd.f32 0.0, %v1579
        %1581 = vdwg.mxu0
        %v1582 = vadd.f32 %v1476, %v1580
        %v1583 = vperm.slane %v1132, 2
        %v1584 = vadd.f32 %v1582, %v1583
        %v1585 = vsel %vm419, %v1584, 0.0
        %1586 = vadd.xlane.f32.xlu0 %v1585
        %v1587 = vpop.xlane.xlu0 %1586
        %v1588 = vmul.f32 %v1587, %v876
        %v1589 = vsub.f32 %v1584, %v1588
        %v1590 = vmul.f32 %v1589, %v1589
        %v1591 = vsel %vm419, %v1590, 0.0
        %1592 = vadd.xlane.f32.xlu0 %v1591
        %v1593 = vpop.xlane.xlu0 %1592
        %v1594 = vmul.f32 %v1593, %v876
        %v1595 = vadd.f32 %v1594, 1e-05
        %v1596 = vrsqrt.pop %v1595
        %v1597 = vmul.f32 %v1596, %v1595
        %v1598 = vmul.f32 %v1597, %v1596
        %v1599 = vmul.f32 0.5, %v1598
        %v1600 = vsub.f32 1.5, %v1599
        %v1601 = vmul.f32 %v1596, %v1600
        %vm1602 = vweird.f32 %v1595
        %vm1603 = vweird.f32 %v1596
        %vm1604 = vmor %vm1602, %vm1603
        %v1605 = vsel %vm1604, %v1596, %v1601
        %v1606 = vmul.f32 %v1589, %v1605
        %v1607 = vperm.slane %v1132, 3
        %v1608 = vmul.f32 %v1606, %v1607
        %v1609 = vperm.slane %v1132, 4
        %v1610 = vadd.f32 %v1608, %v1609
        %v1611 = vadd.f32 %v1131, %v1610
        %v1612 = vld [vmem:[%s9] sm:$0xff]
        %v1613 = vld [vmem:[%s9 + $0x8] sm:$0xff]
        %v1614 = vld [vmem:[%s9 + $0x10] sm:$0xff]
        %v1615 = vld [vmem:[%s9 + $0x18] sm:$0xff]
        %v1616 = vld [vmem:[%s9 + $0x20] sm:$0xff]
        %v1617 = vld [vmem:[%s9 + $0x28] sm:$0xff]
        %v1618 = vld [vmem:[%s9 + $0x30] sm:$0xff]
        %v1619 = vld [vmem:[%s9 + $0x38] sm:$0xff]
        %v1620 = vperm.slane %v1132, 1
        %v1621 = vperm.slane %v1133, 1
        %v1623 = vsel %vm419, %v1611, 0
        %1625 = vmatpush.msra.mxu0 0.0
        %1626 = vmatpush.msra.mxu0 0.0
        %1627 = vmatpush.msra.mxu0 0.0
        %1628 = vmatpush.msra.mxu0 0.0
        %1629 = vmatpush.msra.mxu0 0.0
        %1630 = vmatpush.msra.mxu0 0.0
        %1631 = vmatpush.msra.mxu0 0.0
        %1632 = vmatpush.msra.mxu0 0.0
        %1633 = vmatpush.msra.mxu0 0.0
        %1634 = vmatpush.msra.mxu0 0.0
        %1635 = vmatpush.msra.mxu0 0.0
        %1636 = vmatpush.msra.mxu0 0.0
        %1637 = vmatpush.msra.mxu0 %v1618
        %1638 = vmatpush.msra.mxu0 %v1616
        %1639 = vmatpush.msra.mxu0 %v1614
        %1640 = vmatpush.msra.mxu0 %v1612
        %1641 = vmatmul.f32.gmra.mxu0 %v1623
        %v1642 = vpop.f32.mrf.mxu0
        %v1643 = vadd.f32 %v1620, %v1642
        %1644 = vdwg.mxu0
        %1645 = vmatpush.msra.mxu0 0.0
        %1646 = vmatpush.msra.mxu0 0.0
        %1647 = vmatpush.msra.mxu0 0.0
        %1648 = vmatpush.msra.mxu0 0.0
        %1649 = vmatpush.msra.mxu0 0.0
        %1650 = vmatpush.msra.mxu0 0.0
        %1651 = vmatpush.msra.mxu0 0.0
        %1652 = vmatpush.msra.mxu0 0.0
        %1653 = vmatpush.msra.mxu0 0.0
        %1654 = vmatpush.msra.mxu0 0.0
        %1655 = vmatpush.msra.mxu0 0.0
        %1656 = vmatpush.msra.mxu0 0.0
        %1657 = vmatpush.msra.mxu0 %v1619
        %1658 = vmatpush.msra.mxu0 %v1617
        %1659 = vmatpush.msra.mxu0 %v1615
        %1660 = vmatpush.msra.mxu0 %v1613
        %1661 = vmatmul.f32.gmra.mxu0 %v1623
        %v1662 = vpop.f32.mrf.mxu0
        %v1663 = vadd.f32 %v1621, %v1662
        %1664 = vdwg.mxu0
        %v1665 = vmul.f32 %v1643, 0.5
        %v1666 = vmul.f32 %v1663, 0.5
        %v1667 = vmul.f32 %v1643, 0.70710677
        %v1668 = vmul.f32 %v1663, 0.70710677
        %vm1669 = vcmp.ge.f32.partialorder %v1667, 0.0
        %vm1670 = vcmp.ge.f32.partialorder %v1668, 0.0
        %v1671 = vsel %vm1669, 1.0, -1.0
        %v1672 = vsel %vm1670, 1.0, -1.0
        %v1673 = vand.u32 2147483647, %v1667
        %v1674 = vand.u32 2147483647, %v1668
        %v1675 = vmul.f32 %v1673, 0.3275911
        %v1676 = vmul.f32 %v1674, 0.3275911
        %v1677 = vadd.f32 %v1675, 1.0
        %v1678 = vadd.f32 %v1676, 1.0
        %v1679 = vrcp.pop %v1677
        %v1680 = vmul.f32 %v1677, %v1679
        %v1681 = vsub.f32 1.0, %v1680
        %v1682 = vmul.f32 %v1679, %v1681
        %v1683 = vadd.f32 %v1679, %v1682
        %vm1684 = vweird.f32 %v1677
        %vm1685 = vweird.f32 %v1679
        %vm1686 = vmor %vm1684, %vm1685
        %v1687 = vsel %vm1686, %v1679, %v1683
        %v1688 = vand.u32 2147483647, %v1677
        %vm1689 = vcmp.eq.f32.partialorder %v1688, 8.507059e+37
        %v1690 = vand.u32 %v1677, 2147483648
        %v1691 = vor.u32 1.1754944e-38, %v1690
        %v1692 = vsel %vm1689, %v1691, %v1687
        %v1693 = vmul.f32 1.0, %v1692
        %v1694 = vrcp.pop %v1678
        %v1695 = vmul.f32 %v1678, %v1694
        %v1696 = vsub.f32 1.0, %v1695
        %v1697 = vmul.f32 %v1694, %v1696
        %v1698 = vadd.f32 %v1694, %v1697
        %vm1699 = vweird.f32 %v1678
        %vm1700 = vweird.f32 %v1694
        %vm1701 = vmor %vm1699, %vm1700
        %v1702 = vsel %vm1701, %v1694, %v1698
        %v1703 = vand.u32 2147483647, %v1678
        %vm1704 = vcmp.eq.f32.partialorder %v1703, 8.507059e+37
        %v1705 = vand.u32 %v1678, 2147483648
        %v1706 = vor.u32 1.1754944e-38, %v1705
        %v1707 = vsel %vm1704, %v1706, %v1702
        %v1708 = vmul.f32 1.0, %v1707
        %v1709 = vmul.f32 %v1693, 1.0614054
        %v1710 = vmul.f32 %v1708, 1.0614054
        %v1711 = vadd.f32 %v1709, -1.4531521
        %v1712 = vadd.f32 %v1710, -1.4531521
        %v1713 = vmul.f32 %v1711, %v1693
        %v1714 = vmul.f32 %v1712, %v1708
        %v1715 = vadd.f32 %v1713, 1.4214138
        %v1716 = vadd.f32 %v1714, 1.4214138
        %v1717 = vmul.f32 %v1715, %v1693
        %v1718 = vmul.f32 %v1716, %v1708
        %v1719 = vadd.f32 %v1717, -0.28449672
        %v1720 = vadd.f32 %v1718, -0.28449672
        %v1721 = vmul.f32 %v1719, %v1693
        %v1722 = vmul.f32 %v1720, %v1708
        %v1723 = vadd.f32 %v1721, 0.2548296
        %v1724 = vadd.f32 %v1722, 0.2548296
        %v1725 = vmul.f32 %v1723, %v1693
        %v1726 = vmul.f32 %v1724, %v1708
        %v1727 = vsub.f32 0.0, %v1673
        %v1728 = vsub.f32 0.0, %v1674
        %v1729 = vmul.f32 %v1727, %v1673
        %v1730 = vmul.f32 %v1728, %v1674
        %v1731 = vmul.f32 %v1729, 1.442695
        %v1732 = vpow.pop %v1731
        %v1733 = vmul.f32 %v1730, 1.442695
        %v1734 = vpow.pop %v1733
        %v1735 = vmul.f32 %v1725, %v1732
        %v1736 = vmul.f32 %v1726, %v1734
        %v1737 = vsub.f32 1.0, %v1735
        %v1738 = vsub.f32 1.0, %v1736
        %v1739 = vmul.f32 %v1671, %v1737
        %v1740 = vmul.f32 %v1672, %v1738
        %v1741 = vadd.f32 %v1739, 1.0
        %v1742 = vadd.f32 %v1740, 1.0
        %v1743 = vmul.f32 %v1665, %v1741
        %v1744 = vmul.f32 %v1666, %v1742
        %v1745 = vld [vmem:[%s10] sm:$0xff]
        %v1746 = vld [vmem:[%s10 + $0x8] sm:$0xff]
        %v1747 = vld [vmem:[%s10 + $0x10] sm:$0xff]
        %v1748 = vld [vmem:[%s10 + $0x18] sm:$0xff]
        %v1749 = vld [vmem:[%s10 + $0x20] sm:$0xff]
        %v1750 = vld [vmem:[%s10 + $0x28] sm:$0xff]
        %v1751 = vld [vmem:[%s10 + $0x30] sm:$0xff]
        %v1752 = vld [vmem:[%s10 + $0x38] sm:$0xff]
        %v1753 = vld [vmem:[%s10 + $0x40] sm:$0xff]
        %v1754 = vld [vmem:[%s10 + $0x48] sm:$0xff]
        %v1755 = vld [vmem:[%s10 + $0x50] sm:$0xff]
        %v1756 = vld [vmem:[%s10 + $0x58] sm:$0xff]
        %v1757 = vld [vmem:[%s10 + $0x60] sm:$0xff]
        %v1758 = vld [vmem:[%s10 + $0x68] sm:$0xff]
        %v1759 = vld [vmem:[%s10 + $0x70] sm:$0xff]
        %v1760 = vld [vmem:[%s10 + $0x78] sm:$0xff]
        %v1761 = vld [vmem:[%s10 + $0x80] sm:$0xff]
        %v1762 = vld [vmem:[%s10 + $0x88] sm:$0xff]
        %v1763 = vld [vmem:[%s10 + $0x90] sm:$0xff]
        %v1764 = vld [vmem:[%s10 + $0x98] sm:$0xff]
        %v1765 = vld [vmem:[%s10 + $0xa0] sm:$0xff]
        %v1766 = vld [vmem:[%s10 + $0xa8] sm:$0xff]
        %v1767 = vld [vmem:[%s10 + $0xb0] sm:$0xff]
        %v1768 = vld [vmem:[%s10 + $0xb8] sm:$0xff]
        %v1769 = vld [vmem:[%s10 + $0xc0] sm:$0xff]
        %v1770 = vld [vmem:[%s10 + $0xc8] sm:$0xff]
        %v1771 = vld [vmem:[%s10 + $0xd0] sm:$0xff]
        %v1772 = vld [vmem:[%s10 + $0xd8] sm:$0xff]
        %v1773 = vld [vmem:[%s10 + $0xe0] sm:$0xff]
        %v1774 = vld [vmem:[%s10 + $0xe8] sm:$0xff]
        %v1775 = vld [vmem:[%s10 + $0xf0] sm:$0xff]
        %v1776 = vld [vmem:[%s10 + $0xf8] sm:$0xff]
        %v1777 = vperm.slane %v1132, 5
        %1778 = vmatpush.msra.mxu0 %v1760
        %1779 = vmatpush.msra.mxu0 %v1759
        %1780 = vmatpush.msra.mxu0 %v1758
        %1781 = vmatpush.msra.mxu0 %v1757
        %1782 = vmatpush.msra.mxu0 %v1756
        %1783 = vmatpush.msra.mxu0 %v1755
        %1784 = vmatpush.msra.mxu0 %v1754
        %1785 = vmatpush.msra.mxu0 %v1753
        %1786 = vmatpush.msra.mxu0 %v1752
        %1787 = vmatpush.msra.mxu0 %v1751
        %1788 = vmatpush.msra.mxu0 %v1750
        %1789 = vmatpush.msra.mxu0 %v1749
        %1790 = vmatpush.msra.mxu0 %v1748
        %1791 = vmatpush.msra.mxu0 %v1747
        %1792 = vmatpush.msra.mxu0 %v1746
        %1793 = vmatpush.msra.mxu0 %v1745
        %1794 = vmatmul.f32.gmra.mxu0 %v1743
        %v1795 = vpop.f32.mrf.mxu0
        %v1796 = vadd.f32 %v1777, %v1795
        %1797 = vdwg.mxu0
        %1798 = vmatpush.msra.mxu0 %v1776
        %1799 = vmatpush.msra.mxu0 %v1775
        %1800 = vmatpush.msra.mxu0 %v1774
        %1801 = vmatpush.msra.mxu0 %v1773
        %1802 = vmatpush.msra.mxu0 %v1772
        %1803 = vmatpush.msra.mxu0 %v1771
        %1804 = vmatpush.msra.mxu0 %v1770
        %1805 = vmatpush.msra.mxu0 %v1769
        %1806 = vmatpush.msra.mxu0 %v1768
        %1807 = vmatpush.msra.mxu0 %v1767
        %1808 = vmatpush.msra.mxu0 %v1766
        %1809 = vmatpush.msra.mxu0 %v1765
        %1810 = vmatpush.msra.mxu0 %v1764
        %1811 = vmatpush.msra.mxu0 %v1763
        %1812 = vmatpush.msra.mxu0 %v1762
        %1813 = vmatpush.msra.mxu0 %v1761
        %1814 = vmatmul.f32.gmra.mxu0 %v1744
        %v1815 = vpop.f32.mrf.mxu0
        %v1816 = vadd.f32 %v1796, %v1815
        %1817 = vdwg.mxu0
        %v1818 = vsel %vm419, %v1816, 0.0
        %1819 = vadd.xlane.f32.xlu0 %v1818
        %v1820 = vpop.xlane.xlu0 %1819
        %v1821 = vmul.f32 %v1820, %v876
        %v1822 = vsub.f32 %v1816, %v1821
        %v1823 = vmul.f32 %v1822, %v1822
        %v1824 = vsel %vm419, %v1823, 0.0
        %1825 = vadd.xlane.f32.xlu0 %v1824
        %v1826 = vpop.xlane.xlu0 %1825
        %v1827 = vmul.f32 %v1826, %v876
        %v1828 = vadd.f32 %v1827, 1e-05
        %v1829 = vrsqrt.pop %v1828
        %v1830 = vmul.f32 %v1829, %v1828
        %v1831 = vmul.f32 %v1830, %v1829
        %v1832 = vmul.f32 0.5, %v1831
        %v1833 = vsub.f32 1.5, %v1832
        %v1834 = vmul.f32 %v1829, %v1833
        %vm1835 = vweird.f32 %v1828
        %vm1836 = vweird.f32 %v1829
        %vm1837 = vmor %vm1835, %vm1836
        %v1838 = vsel %vm1837, %v1829, %v1834
        %v1839 = vmul.f32 %v1822, %v1838
        %v1840 = vmul.f32 %v1839, %v1607
        %v1841 = vadd.f32 %v1840, %v1609
        %v1842 = vadd.f32 %v1611, %v1841
        %1843 = vst.msk [vmem:[%s404] sm:$0xff] %vm419, %v1842
        %s1844 = sand.u32 %s291, 1
        %s1845 = scalar_lea.sflag [#allocation3], %s1844
        %s1846 = sand.u32 %s291, 1
        %s1847 = smul.addr %s1846, 8
        %s1848 = scalar_lea.vmem [#allocation2], %s1847
        // Predicated region
        $region69: #{encoder_forward.1} parent=67 // pred_check
          %p1849 = pneg %p301
        $region70: #{encoder_forward.1} parent=67 // pred_check_branch
          %1851 = sbr.rel (%p1849) target = $region72
        $region71: #{encoder_forward.1} parent=67 // pred_region
          %1853 = vsyncadd %s1845, 0
          %s1854 = smul.addr %s26, 8
          %s1855 = scalar_lea.hbm %s12, %s1854
          %s1857 = sshll.u32 %s1848, 4
          %s1858 = int_to_ptr.vmem [resolvable:$true] %s1857
          %s1859 = sshll.u32 %s1855, 4
          %s1860 = int_to_ptr.hbm [resolvable:$true] %s1859
          %1862 = dma.vmem_to_hbm [thread:$0]  %s1858, 128, %s1860, %s1845
        $region72: #{encoder_forward.1} parent=67 // pred_fallthru
          _
      $region68: #{encoder_forward.1} parent=5 // pred_fallthru
        _
      %p1863 = scmp.le.s32.totalorder 2, %s21
      // Predicated region
      $region73: #{encoder_forward.1} parent=5 // pred_check
        %p1864 = pneg %p1863
      $region74: #{encoder_forward.1} parent=5 // pred_check_branch
        %1866 = sbr.rel (%p1864) target = $region76
      $region75: #{encoder_forward.1} parent=5 // pred_region
        %s1867 = ssub.s32 %s21, 2
        // Predicated region
        $region77: #{encoder_forward.1} parent=75 // pred_check
          %p1868 = pneg %p307
        $region78: #{encoder_forward.1} parent=75 // pred_check_branch
          %1870 = sbr.rel (%p1868) target = $region80
        $region79: #{encoder_forward.1} parent=75 // pred_region
          %s1871 = sand.u32 %s292, 1
          %s1872 = scalar_lea.sflag [#allocation3], %s1871
          %s1873 = sand.u32 %s292, 1
          %s1874 = smul.addr %s1873, 8
          %s1875 = scalar_lea.vmem [#allocation2], %s1874
          %1877 = dma.done %s1872, 128
        $region80: #{encoder_forward.1} parent=75 // pred_fallthru
          _
      $region76: #{encoder_forward.1} parent=5 // pred_fallthru
        _
    $region6: #{encoder_forward.1} parent=1 // loop_footer
      %s25 = sadd.s32 1, %s21
    $region7: #{encoder_forward.1} parent=1 // loop_footer_branch
      %20 = sbr.rel target = $region3
    $region8: #{encoder_forward.1} parent=1 // loop_exit
      _
    %1878 = vsyncpa [#allocation3], 1
    %s1879 = scalar_lea.sflag [#allocation3], 1
    %1880 = vsyncpa %s1879, 1

</llo_original>
